<compile_context>
chip_gen: v7x
topology: tpu7x:2x2x1
jax: 0.10.0
libtpu: 0.0.40
codegen_flags: <defaults>
</compile_context>

<pallas_src>
import functools

import jax
import jax.numpy as jnp
from jax.experimental import pallas as pl
from jax.experimental.pallas import tpu as pltpu


def _round_up(n, m):
    return ((n + m - 1) // m) * m


# ----------------------------- Pallas kernels ------------------------------

def _matmul_bias_kernel(x_ref, wT_ref, b_ref, o_ref, *, relu):
    # x: (tm, Kp) bf16, wT: (Kp, Np) bf16, b: (1, Np) f32 -> o: (tm, Np) f32
    acc = jnp.dot(x_ref[...], wT_ref[...], preferred_element_type=jnp.float32)
    acc = acc + b_ref[...]
    if relu:
        acc = jnp.maximum(acc, 0.0)
    o_ref[...] = acc.astype(o_ref.dtype)


def _fc_head_kernel(x_ref, w1_ref, b1_ref, w2_ref, b2_ref, w3_ref, b3_ref,
                    o_ref):
    # Fused fc1 -> ReLU -> fc2 -> ReLU -> fc3; intermediates stay in VMEM/vregs.
    h = jnp.dot(x_ref[...], w1_ref[...], preferred_element_type=jnp.float32)
    h = jnp.maximum(h + b1_ref[...], 0.0)
    h = jnp.dot(h.astype(w2_ref.dtype), w2_ref[...],
                preferred_element_type=jnp.float32)
    h = jnp.maximum(h + b2_ref[...], 0.0)
    h = jnp.dot(h.astype(w3_ref.dtype), w3_ref[...],
                preferred_element_type=jnp.float32)
    o_ref[...] = (h + b3_ref[...]).astype(o_ref.dtype)


def _max4_kernel(a_ref, b_ref, c_ref, d_ref, o_ref):
    # elementwise max over the 4 pooling-window positions (lane-dense layout)
    o_ref[...] = jnp.maximum(jnp.maximum(a_ref[...], b_ref[...]),
                             jnp.maximum(c_ref[...], d_ref[...]))


# ------------------------------ wrappers ------------------------------------

def linear_padded(x, wT_pad, b_pad, *, relu, n_valid, tm=256):
    """y = x @ W.T + b (optional ReLU) with K/N pre-padded weights.

    x: (M, K) f32. wT_pad: (Kp, Np) bf16 (zero-padded). b_pad: (1, Np) f32.
    Returns (M, n_valid) f32.  Gridded over M rows, lane-dense Np=128 output.
    """
    M, K = x.shape
    Kp, Np = wT_pad.shape
    Mp = _round_up(M, tm)
    xp = jnp.pad(x, ((0, Mp - M), (0, Kp - K))).astype(jnp.bfloat16)

    kernel = functools.partial(_matmul_bias_kernel, relu=relu)
    out = pl.pallas_call(
        kernel,
        out_shape=jax.ShapeDtypeStruct((Mp, Np), jnp.float32),
        grid=(Mp // tm,),
        in_specs=[
            pl.BlockSpec((tm, Kp), lambda i: (i, 0)),   # row tile of x
            pl.BlockSpec((Kp, Np), lambda i: (0, 0)),   # resident weights
            pl.BlockSpec((1, Np), lambda i: (0, 0)),    # resident bias
        ],
        out_specs=pl.BlockSpec((tm, Np), lambda i: (i, 0)),
        compiler_params=pltpu.CompilerParams(
            dimension_semantics=("parallel",)),
    )(xp, wT_pad, b_pad)
    return out[:M, :n_valid]


def conv2d_relu(x, wT_pad, b_pad, *, cout, ksize):
    """Valid (no-pad, stride-1) conv + ReLU via im2col + Pallas matmul.

    x: (B, Cin, H, W).  wT_pad: (Kp, 128) bf16 with the (Cin*k*k, Cout) weight
    in the top-left corner.  b_pad: (1, 128) f32."""
    B, Cin, H, W = x.shape
    Ho, Wo = H - ksize + 1, W - ksize + 1
    # im2col (XLA glue): patch order (Cin, ki, kj) matches the weight flatten.
    patches = jnp.stack(
        [x[:, :, ki:ki + Ho, kj:kj + Wo]
         for ki in range(ksize) for kj in range(ksize)],
        axis=2)                                              # (B,Cin,k*k,Ho,Wo)
    cols = patches.reshape(B, Cin * ksize * ksize, Ho * Wo)
    cols = cols.transpose(0, 2, 1).reshape(B * Ho * Wo, Cin * ksize * ksize)
    y = linear_padded(cols, wT_pad, b_pad, relu=True, n_valid=cout)
    return y.reshape(B, Ho, Wo, cout).transpose(0, 3, 1, 2)   # NCHW


def maxpool2x2(x):
    """MaxPool2d(kernel=2, stride=2) on a lane-dense (rows, 128) flattening."""
    B, C, H, W = x.shape
    Hp, Wp = H // 2, W // 2
    total = B * C * Hp * Wp
    lanes = 128
    rows = _round_up(pl.cdiv(total, lanes), 8)        # sublane-aligned rows
    pad = rows * lanes - total
    views = [
        x[:, :, 0::2, 0::2], x[:, :, 0::2, 1::2],
        x[:, :, 1::2, 0::2], x[:, :, 1::2, 1::2],
    ]
    flat = [jnp.pad(v.reshape(-1), (0, pad)).reshape(rows, lanes)
            for v in views]
    out = pl.pallas_call(
        _max4_kernel,
        out_shape=jax.ShapeDtypeStruct((rows, lanes), jnp.float32),
    )(*flat)
    return out.reshape(-1)[:total].reshape(B, C, Hp, Wp)


def fc_head(x, pp):
    """Fused fc1->ReLU->fc2->ReLU->fc3 in one pallas_call. x: (B, 400) f32."""
    B, K = x.shape
    Kp = pp["fc1_wT"].shape[0]                # 512
    Np = 128
    Mp = _round_up(B, 16) if B <= 256 else _round_up(B, 256)
    tm = min(256, Mp)
    xp = jnp.pad(x, ((0, Mp - B), (0, Kp - K))).astype(jnp.bfloat16)

    out = pl.pallas_call(
        _fc_head_kernel,
        out_shape=jax.ShapeDtypeStruct((Mp, Np), jnp.float32),
        grid=(Mp // tm,),
        in_specs=[
            pl.BlockSpec((tm, Kp), lambda i: (i, 0)),
            pl.BlockSpec((Kp, Np), lambda i: (0, 0)),   # fc1 W (resident)
            pl.BlockSpec((1, Np), lambda i: (0, 0)),
            pl.BlockSpec((Np, Np), lambda i: (0, 0)),   # fc2 W
            pl.BlockSpec((1, Np), lambda i: (0, 0)),
            pl.BlockSpec((Np, Np), lambda i: (0, 0)),   # fc3 W
            pl.BlockSpec((1, Np), lambda i: (0, 0)),
        ],
        out_specs=pl.BlockSpec((tm, Np), lambda i: (i, 0)),
        compiler_params=pltpu.CompilerParams(
            dimension_semantics=("parallel",)),
    )(xp, pp["fc1_wT"], pp["fc1_b"], pp["fc2_wT"], pp["fc2_b"],
      pp["fc3_wT"], pp["fc3_b"])
    return out[:B, :10]


# ------------------------------ params --------------------------------------

def init_params(key):
    """Deterministic init mirroring PyTorch default U(-1/sqrt(fan_in), +...)."""
    def uniform(k, shape, fan_in):
        bound = 1.0 / jnp.sqrt(jnp.float32(fan_in))
        return jax.random.uniform(k, shape, jnp.float32, -bound, bound)

    ks = jax.random.split(key, 10)
    p = {}
    p["conv1_w"] = uniform(ks[0], (6, 3, 5, 5), 3 * 5 * 5)
    p["conv1_b"] = uniform(ks[1], (6,), 3 * 5 * 5)
    p["conv2_w"] = uniform(ks[2], (16, 6, 5, 5), 6 * 5 * 5)
    p["conv2_b"] = uniform(ks[3], (16,), 6 * 5 * 5)
    p["fc1_w"] = uniform(ks[4], (120, 400), 400)
    p["fc1_b"] = uniform(ks[5], (120,), 400)
    p["fc2_w"] = uniform(ks[6], (84, 120), 120)
    p["fc2_b"] = uniform(ks[7], (84,), 120)
    p["fc3_w"] = uniform(ks[8], (10, 84), 84)
    p["fc3_b"] = uniform(ks[9], (10,), 84)
    return p


def prepare_params(p):
    """One-time prep: transpose/flatten, zero-pad K->mult of 128 and N->128,
    cast weights to bf16 (bias stays f32). Done once, outside the jitted fwd."""
    def prep(w2d, b, kp, np_):
        n, k = w2d.shape
        wT = jnp.zeros((kp, np_), jnp.float32).at[:k, :n].set(w2d.T)
        bp = jnp.zeros((1, np_), jnp.float32).at[0, :n].set(b)
        return wT.astype(jnp.bfloat16), bp

    pp = {}
    pp["conv1_wT"], pp["conv1_b"] = prep(p["conv1_w"].reshape(6, 75),
                                         p["conv1_b"], 128, 128)
    pp["conv2_wT"], pp["conv2_b"] = prep(p["conv2_w"].reshape(16, 150),
                                         p["conv2_b"], 256, 128)
    pp["fc1_wT"], pp["fc1_b"] = prep(p["fc1_w"], p["fc1_b"], 512, 128)
    pp["fc2_wT"], pp["fc2_b"] = prep(p["fc2_w"], p["fc2_b"], 128, 128)
    pp["fc3_wT"], pp["fc3_b"] = prep(p["fc3_w"], p["fc3_b"], 128, 128)
    return pp


# ------------------------------ model ---------------------------------------

def net_forward(pp, x):
    # x: (B, 3, 32, 32) NCHW
    x = maxpool2x2(conv2d_relu(x, pp["conv1_wT"], pp["conv1_b"],
                               cout=6, ksize=5))              # (B, 6, 14, 14)
    x = maxpool2x2(conv2d_relu(x, pp["conv2_wT"], pp["conv2_b"],
                               cout=16, ksize=5))             # (B, 16, 5, 5)
    x = x.reshape(x.shape[0], 16 * 5 * 5)                     # (B, 400)
    return fc_head(x, pp)                                     # (B, 10)


def net_forward_ref(p, x):
    """Pure-JAX reference for sanity checking."""
    def conv(x, w, b):
        y = jax.lax.conv_general_dilated(
            x, w, window_strides=(1, 1), padding="VALID",
            dimension_numbers=("NCHW", "OIHW", "NCHW"))
        return jax.nn.relu(y + b[None, :, None, None])

    def pool(x):
        return jax.lax.reduce_window(
            x, -jnp.inf, jax.lax.max, (1, 1, 2, 2), (1, 1, 2, 2), "VALID")

    x = pool(conv(x, p["conv1_w"], p["conv1_b"]))
    x = pool(conv(x, p["conv2_w"], p["conv2_b"]))
    x = x.reshape(x.shape[0], 400)
    x = jax.nn.relu(x @ p["fc1_w"].T + p["fc1_b"])
    x = jax.nn.relu(x @ p["fc2_w"].T + p["fc2_b"])
    return x @ p["fc3_w"].T + p["fc3_b"]


if __name__ == "__main__":
    key = jax.random.PRNGKey(0)
    k_params, k_x = jax.random.split(key)
    params = init_params(k_params)
    pp = prepare_params(params)                 # one-time weight prep
    # Net's view(-1, 16*5*5) implies 32x32 spatial input; small batch = 2.
    x = jax.random.normal(k_x, (2, 3, 32, 32), jnp.float32)

    out = jax.block_until_ready(jax.jit(net_forward)(pp, x))
    assert out.shape == (2, 10), out.shape

    ref = jax.block_until_ready(net_forward_ref(params, x))
    # bf16 MXU inputs with f32 accumulation: ~1% relative error budget.
    assert jnp.allclose(out, ref, rtol=3e-2, atol=3e-2), "mismatch vs reference"

    print("KERNEL_OK")
</pallas_src>

<mosaic_0001>
module attributes {stable_mosaic.version = 11 : i64} {
  func.func @_matmul_bias_kernel(%arg0: i32, %arg1: memref<256x128xbf16, #tpu.memory_space<vmem>>, %arg2: memref<128x128xbf16, #tpu.memory_space<vmem>>, %arg3: memref<1x128xf32, #tpu.memory_space<vmem>>, %arg4: memref<256x128xf32, #tpu.memory_space<vmem>>) attributes {dimension_semantics = [#tpu.dimension_semantics<parallel>], iteration_bounds = array<i64: 7>, scalar_prefetch = 0 : i64, scratch_operands = 0 : i64, tpu.core_type = #tpu.core_type<tc>, window_params = [{transform_indices = @transform_0, window_bounds = array<i64: 256, 128>}, {pipeline_mode = #tpu.pipeline_mode<synchronous>, transform_indices = @transform_1, window_bounds = array<i64: 128, 128>}, {pipeline_mode = #tpu.pipeline_mode<synchronous>, transform_indices = @transform_2, window_bounds = array<i64: 1, 128>}, {transform_indices = @transform_3, window_bounds = array<i64: 256, 128>}]} {
    %c0 = arith.constant 0 : index
    %c0_0 = arith.constant 0 : index
    %0 = vector.load %arg1[%c0, %c0_0] : memref<256x128xbf16, #tpu.memory_space<vmem>>, vector<256x128xbf16>
    %c0_1 = arith.constant 0 : index
    %c0_2 = arith.constant 0 : index
    %1 = vector.load %arg2[%c0_1, %c0_2] : memref<128x128xbf16, #tpu.memory_space<vmem>>, vector<128x128xbf16>
    %cst = arith.constant dense<0.000000e+00> : vector<256x128xf32>
    %2 = tpu.matmul %0, %1, %cst {dimension_numbers = #tpu.dot_dimension_numbers<[1], [0], [0], [1], [0, 0, 1, 1], [], []>} : vector<256x128xbf16>, vector<128x128xbf16>, vector<256x128xf32> -> vector<256x128xf32>
    %c0_3 = arith.constant 0 : index
    %c0_4 = arith.constant 0 : index
    %3 = vector.load %arg3[%c0_3, %c0_4] : memref<1x128xf32, #tpu.memory_space<vmem>>, vector<1x128xf32>
    %4 = vector.broadcast %3 : vector<1x128xf32> to vector<256x128xf32>
    %5 = arith.addf %2, %4 : vector<256x128xf32>
    %cst_5 = arith.constant 0.000000e+00 : f32
    %6 = vector.broadcast %cst_5 : f32 to vector<256x128xf32>
    %7 = arith.maximumf %5, %6 : vector<256x128xf32>
    %c0_6 = arith.constant 0 : index
    %c0_7 = arith.constant 0 : index
    %8 = vector.load %arg4[%c0_6, %c0_7] : memref<256x128xf32, #tpu.memory_space<vmem>>, vector<256x128xf32>
    tpu.vector_store %arg4[%c0_6, %c0_7], %7 {strides = array<i32>} : memref<256x128xf32, #tpu.memory_space<vmem>>, vector<256x128xf32>,
    return
  }
  func.func @transform_0(%arg0: i32) -> (i32, i32) {
    %c0_i32 = arith.constant 0 : i32
    %c0_i32_0 = arith.constant 0 : i32
    return %arg0, %c0_i32 : i32, i32
  }
  func.func @transform_1(%arg0: i32) -> (i32, i32) {
    %c0_i32 = arith.constant 0 : i32
    %c0_i32_0 = arith.constant 0 : i32
    %c0_i32_1 = arith.constant 0 : i32
    return %c0_i32, %c0_i32_0 : i32, i32
  }
  func.func @transform_2(%arg0: i32) -> (i32, i32) {
    %c0_i32 = arith.constant 0 : i32
    %c0_i32_0 = arith.constant 0 : i32
    %c0_i32_1 = arith.constant 0 : i32
    return %c0_i32, %c0_i32_0 : i32, i32
  }
  func.func @transform_3(%arg0: i32) -> (i32, i32) {
    %c0_i32 = arith.constant 0 : i32
    %c0_i32_0 = arith.constant 0 : i32
    return %arg0, %c0_i32 : i32, i32
  }
}

module attributes {stable_mosaic.version = 11 : i64} {
  func.func @_max4_kernel(%arg0: memref<24x128xf32, #tpu.memory_space<vmem>>, %arg1: memref<24x128xf32, #tpu.memory_space<vmem>>, %arg2: memref<24x128xf32, #tpu.memory_space<vmem>>, %arg3: memref<24x128xf32, #tpu.memory_space<vmem>>, %arg4: memref<24x128xf32, #tpu.memory_space<vmem>>) attributes {dimension_semantics = [], scalar_prefetch = 0 : i64, scratch_operands = 0 : i64, tpu.core_type = #tpu.core_type<tc>} {
    %c0 = arith.constant 0 : index
    %c0_0 = arith.constant 0 : index
    %0 = vector.load %arg0[%c0, %c0_0] : memref<24x128xf32, #tpu.memory_space<vmem>>, vector<24x128xf32>
    %c0_1 = arith.constant 0 : index
    %c0_2 = arith.constant 0 : index
    %1 = vector.load %arg1[%c0_1, %c0_2] : memref<24x128xf32, #tpu.memory_space<vmem>>, vector<24x128xf32>
    %2 = arith.maximumf %0, %1 : vector<24x128xf32>
    %c0_3 = arith.constant 0 : index
    %c0_4 = arith.constant 0 : index
    %3 = vector.load %arg2[%c0_3, %c0_4] : memref<24x128xf32, #tpu.memory_space<vmem>>, vector<24x128xf32>
    %c0_5 = arith.constant 0 : index
    %c0_6 = arith.constant 0 : index
    %4 = vector.load %arg3[%c0_5, %c0_6] : memref<24x128xf32, #tpu.memory_space<vmem>>, vector<24x128xf32>
    %5 = arith.maximumf %3, %4 : vector<24x128xf32>
    %6 = arith.maximumf %2, %5 : vector<24x128xf32>
    %c0_7 = arith.constant 0 : index
    %c0_8 = arith.constant 0 : index
    %7 = vector.load %arg4[%c0_7, %c0_8] : memref<24x128xf32, #tpu.memory_space<vmem>>, vector<24x128xf32>
    tpu.vector_store %arg4[%c0_7, %c0_8], %6 {strides = array<i32>} : memref<24x128xf32, #tpu.memory_space<vmem>>, vector<24x128xf32>,
    return
  }
}

module attributes {stable_mosaic.version = 11 : i64} {
  func.func @_matmul_bias_kernel(%arg0: i32, %arg1: memref<256x256xbf16, #tpu.memory_space<vmem>>, %arg2: memref<256x128xbf16, #tpu.memory_space<vmem>>, %arg3: memref<1x128xf32, #tpu.memory_space<vmem>>, %arg4: memref<256x128xf32, #tpu.memory_space<vmem>>) attributes {dimension_semantics = [#tpu.dimension_semantics<parallel>], iteration_bounds = array<i64: 1>, scalar_prefetch = 0 : i64, scratch_operands = 0 : i64, tpu.core_type = #tpu.core_type<tc>, window_params = [{transform_indices = @transform_0, window_bounds = array<i64: 256, 256>}, {pipeline_mode = #tpu.pipeline_mode<synchronous>, transform_indices = @transform_1, window_bounds = array<i64: 256, 128>}, {pipeline_mode = #tpu.pipeline_mode<synchronous>, transform_indices = @transform_2, window_bounds = array<i64: 1, 128>}, {transform_indices = @transform_3, window_bounds = array<i64: 256, 128>}]} {
    %c0 = arith.constant 0 : index
    %c0_0 = arith.constant 0 : index
    %0 = vector.load %arg1[%c0, %c0_0] : memref<256x256xbf16, #tpu.memory_space<vmem>>, vector<256x256xbf16>
    %c0_1 = arith.constant 0 : index
    %c0_2 = arith.constant 0 : index
    %1 = vector.load %arg2[%c0_1, %c0_2] : memref<256x128xbf16, #tpu.memory_space<vmem>>, vector<256x128xbf16>
    %cst = arith.constant dense<0.000000e+00> : vector<256x128xf32>
    %2 = tpu.matmul %0, %1, %cst {dimension_numbers = #tpu.dot_dimension_numbers<[1], [0], [0], [1], [0, 0, 1, 1], [], []>} : vector<256x256xbf16>, vector<256x128xbf16>, vector<256x128xf32> -> vector<256x128xf32>
    %c0_3 = arith.constant 0 : index
    %c0_4 = arith.constant 0 : index
    %3 = vector.load %arg3[%c0_3, %c0_4] : memref<1x128xf32, #tpu.memory_space<vmem>>, vector<1x128xf32>
    %4 = vector.broadcast %3 : vector<1x128xf32> to vector<256x128xf32>
    %5 = arith.addf %2, %4 : vector<256x128xf32>
    %cst_5 = arith.constant 0.000000e+00 : f32
    %6 = vector.broadcast %cst_5 : f32 to vector<256x128xf32>
    %7 = arith.maximumf %5, %6 : vector<256x128xf32>
    %c0_6 = arith.constant 0 : index
    %c0_7 = arith.constant 0 : index
    %8 = vector.load %arg4[%c0_6, %c0_7] : memref<256x128xf32, #tpu.memory_space<vmem>>, vector<256x128xf32>
    tpu.vector_store %arg4[%c0_6, %c0_7], %7 {strides = array<i32>} : memref<256x128xf32, #tpu.memory_space<vmem>>, vector<256x128xf32>,
    return
  }
  func.func @transform_0(%arg0: i32) -> (i32, i32) {
    %c0_i32 = arith.constant 0 : i32
    %c0_i32_0 = arith.constant 0 : i32
    return %arg0, %c0_i32 : i32, i32
  }
  func.func @transform_1(%arg0: i32) -> (i32, i32) {
    %c0_i32 = arith.constant 0 : i32
    %c0_i32_0 = arith.constant 0 : i32
    %c0_i32_1 = arith.constant 0 : i32
    return %c0_i32, %c0_i32_0 : i32, i32
  }
  func.func @transform_2(%arg0: i32) -> (i32, i32) {
    %c0_i32 = arith.constant 0 : i32
    %c0_i32_0 = arith.constant 0 : i32
    %c0_i32_1 = arith.constant 0 : i32
    return %c0_i32, %c0_i32_0 : i32, i32
  }
  func.func @transform_3(%arg0: i32) -> (i32, i32) {
    %c0_i32 = arith.constant 0 : i32
    %c0_i32_0 = arith.constant 0 : i32
    return %arg0, %c0_i32 : i32, i32
  }
}

module attributes {stable_mosaic.version = 11 : i64} {
  func.func @_max4_kernel(%arg0: memref<8x128xf32, #tpu.memory_space<vmem>>, %arg1: memref<8x128xf32, #tpu.memory_space<vmem>>, %arg2: memref<8x128xf32, #tpu.memory_space<vmem>>, %arg3: memref<8x128xf32, #tpu.memory_space<vmem>>, %arg4: memref<8x128xf32, #tpu.memory_space<vmem>>) attributes {dimension_semantics = [], scalar_prefetch = 0 : i64, scratch_operands = 0 : i64, tpu.core_type = #tpu.core_type<tc>} {
    %c0 = arith.constant 0 : index
    %c0_0 = arith.constant 0 : index
    %0 = vector.load %arg0[%c0, %c0_0] : memref<8x128xf32, #tpu.memory_space<vmem>>, vector<8x128xf32>
    %c0_1 = arith.constant 0 : index
    %c0_2 = arith.constant 0 : index
    %1 = vector.load %arg1[%c0_1, %c0_2] : memref<8x128xf32, #tpu.memory_space<vmem>>, vector<8x128xf32>
    %2 = arith.maximumf %0, %1 : vector<8x128xf32>
    %c0_3 = arith.constant 0 : index
    %c0_4 = arith.constant 0 : index
    %3 = vector.load %arg2[%c0_3, %c0_4] : memref<8x128xf32, #tpu.memory_space<vmem>>, vector<8x128xf32>
    %c0_5 = arith.constant 0 : index
    %c0_6 = arith.constant 0 : index
    %4 = vector.load %arg3[%c0_5, %c0_6] : memref<8x128xf32, #tpu.memory_space<vmem>>, vector<8x128xf32>
    %5 = arith.maximumf %3, %4 : vector<8x128xf32>
    %6 = arith.maximumf %2, %5 : vector<8x128xf32>
    %c0_7 = arith.constant 0 : index
    %c0_8 = arith.constant 0 : index
    %7 = vector.load %arg4[%c0_7, %c0_8] : memref<8x128xf32, #tpu.memory_space<vmem>>, vector<8x128xf32>
    tpu.vector_store %arg4[%c0_7, %c0_8], %6 {strides = array<i32>} : memref<8x128xf32, #tpu.memory_space<vmem>>, vector<8x128xf32>,
    return
  }
}

module attributes {stable_mosaic.version = 11 : i64} {
  func.func @_fc_head_kernel(%arg0: i32, %arg1: memref<16x512xbf16, #tpu.memory_space<vmem>>, %arg2: memref<512x128xbf16, #tpu.memory_space<vmem>>, %arg3: memref<1x128xf32, #tpu.memory_space<vmem>>, %arg4: memref<128x128xbf16, #tpu.memory_space<vmem>>, %arg5: memref<1x128xf32, #tpu.memory_space<vmem>>, %arg6: memref<128x128xbf16, #tpu.memory_space<vmem>>, %arg7: memref<1x128xf32, #tpu.memory_space<vmem>>, %arg8: memref<16x128xf32, #tpu.memory_space<vmem>>) attributes {dimension_semantics = [#tpu.dimension_semantics<parallel>], iteration_bounds = array<i64: 1>, scalar_prefetch = 0 : i64, scratch_operands = 0 : i64, tpu.core_type = #tpu.core_type<tc>, window_params = [{transform_indices = @transform_0, window_bounds = array<i64: 16, 512>}, {pipeline_mode = #tpu.pipeline_mode<synchronous>, transform_indices = @transform_1, window_bounds = array<i64: 512, 128>}, {pipeline_mode = #tpu.pipeline_mode<synchronous>, transform_indices = @transform_2, window_bounds = array<i64: 1, 128>}, {pipeline_mode = #tpu.pipeline_mode<synchronous>, transform_indices = @transform_3, window_bounds = array<i64: 128, 128>}, {pipeline_mode = #tpu.pipeline_mode<synchronous>, transform_indices = @transform_4, window_bounds = array<i64: 1, 128>}, {pipeline_mode = #tpu.pipeline_mode<synchronous>, transform_indices = @transform_5, window_bounds = array<i64: 128, 128>}, {pipeline_mode = #tpu.pipeline_mode<synchronous>, transform_indices = @transform_6, window_bounds = array<i64: 1, 128>}, {transform_indices = @transform_7, window_bounds = array<i64: 16, 128>}]} {
    %c0 = arith.constant 0 : index
    %c0_0 = arith.constant 0 : index
    %0 = vector.load %arg1[%c0, %c0_0] : memref<16x512xbf16, #tpu.memory_space<vmem>>, vector<16x512xbf16>
    %c0_1 = arith.constant 0 : index
    %c0_2 = arith.constant 0 : index
    %1 = vector.load %arg2[%c0_1, %c0_2] : memref<512x128xbf16, #tpu.memory_space<vmem>>, vector<512x128xbf16>
    %cst = arith.constant dense<0.000000e+00> : vector<16x128xf32>
    %2 = tpu.matmul %0, %1, %cst {dimension_numbers = #tpu.dot_dimension_numbers<[1], [0], [0], [1], [0, 0, 1, 1], [], []>} : vector<16x512xbf16>, vector<512x128xbf16>, vector<16x128xf32> -> vector<16x128xf32>
    %c0_3 = arith.constant 0 : index
    %c0_4 = arith.constant 0 : index
    %3 = vector.load %arg3[%c0_3, %c0_4] : memref<1x128xf32, #tpu.memory_space<vmem>>, vector<1x128xf32>
    %4 = vector.broadcast %3 : vector<1x128xf32> to vector<16x128xf32>
    %5 = arith.addf %2, %4 : vector<16x128xf32>
    %cst_5 = arith.constant 0.000000e+00 : f32
    %6 = vector.broadcast %cst_5 : f32 to vector<16x128xf32>
    %7 = arith.maximumf %5, %6 : vector<16x128xf32>
    %8 = arith.truncf %7 : vector<16x128xf32> to vector<16x128xbf16>
    %c0_6 = arith.constant 0 : index
    %c0_7 = arith.constant 0 : index
    %9 = vector.load %arg4[%c0_6, %c0_7] : memref<128x128xbf16, #tpu.memory_space<vmem>>, vector<128x128xbf16>
    %cst_8 = arith.constant dense<0.000000e+00> : vector<16x128xf32>
    %10 = tpu.matmul %8, %9, %cst_8 {dimension_numbers = #tpu.dot_dimension_numbers<[1], [0], [0], [1], [0, 0, 1, 1], [], []>} : vector<16x128xbf16>, vector<128x128xbf16>, vector<16x128xf32> -> vector<16x128xf32>
    %c0_9 = arith.constant 0 : index
    %c0_10 = arith.constant 0 : index
    %11 = vector.load %arg5[%c0_9, %c0_10] : memref<1x128xf32, #tpu.memory_space<vmem>>, vector<1x128xf32>
    %12 = vector.broadcast %11 : vector<1x128xf32> to vector<16x128xf32>
    %13 = arith.addf %10, %12 : vector<16x128xf32>
    %cst_11 = arith.constant 0.000000e+00 : f32
    %14 = vector.broadcast %cst_11 : f32 to vector<16x128xf32>
    %15 = arith.maximumf %13, %14 : vector<16x128xf32>
    %16 = arith.truncf %15 : vector<16x128xf32> to vector<16x128xbf16>
    %c0_12 = arith.constant 0 : index
    %c0_13 = arith.constant 0 : index
    %17 = vector.load %arg6[%c0_12, %c0_13] : memref<128x128xbf16, #tpu.memory_space<vmem>>, vector<128x128xbf16>
    %cst_14 = arith.constant dense<0.000000e+00> : vector<16x128xf32>
    %18 = tpu.matmul %16, %17, %cst_14 {dimension_numbers = #tpu.dot_dimension_numbers<[1], [0], [0], [1], [0, 0, 1, 1], [], []>} : vector<16x128xbf16>, vector<128x128xbf16>, vector<16x128xf32> -> vector<16x128xf32>
    %c0_15 = arith.constant 0 : index
    %c0_16 = arith.constant 0 : index
    %19 = vector.load %arg7[%c0_15, %c0_16] : memref<1x128xf32, #tpu.memory_space<vmem>>, vector<1x128xf32>
    %20 = vector.broadcast %19 : vector<1x128xf32> to vector<16x128xf32>
    %21 = arith.addf %18, %20 : vector<16x128xf32>
    %c0_17 = arith.constant 0 : index
    %c0_18 = arith.constant 0 : index
    %22 = vector.load %arg8[%c0_17, %c0_18] : memref<16x128xf32, #tpu.memory_space<vmem>>, vector<16x128xf32>
    tpu.vector_store %arg8[%c0_17, %c0_18], %21 {strides = array<i32>} : memref<16x128xf32, #tpu.memory_space<vmem>>, vector<16x128xf32>,
    return
  }
  func.func @transform_0(%arg0: i32) -> (i32, i32) {
    %c0_i32 = arith.constant 0 : i32
    %c0_i32_0 = arith.constant 0 : i32
    return %arg0, %c0_i32 : i32, i32
  }
  func.func @transform_1(%arg0: i32) -> (i32, i32) {
    %c0_i32 = arith.constant 0 : i32
    %c0_i32_0 = arith.constant 0 : i32
    %c0_i32_1 = arith.constant 0 : i32
    return %c0_i32, %c0_i32_0 : i32, i32
  }
  func.func @transform_2(%arg0: i32) -> (i32, i32) {
    %c0_i32 = arith.constant 0 : i32
    %c0_i32_0 = arith.constant 0 : i32
    %c0_i32_1 = arith.constant 0 : i32
    return %c0_i32, %c0_i32_0 : i32, i32
  }
  func.func @transform_3(%arg0: i32) -> (i32, i32) {
    %c0_i32 = arith.constant 0 : i32
    %c0_i32_0 = arith.constant 0 : i32
    %c0_i32_1 = arith.constant 0 : i32
    return %c0_i32, %c0_i32_0 : i32, i32
  }
  func.func @transform_4(%arg0: i32) -> (i32, i32) {
    %c0_i32 = arith.constant 0 : i32
    %c0_i32_0 = arith.constant 0 : i32
    %c0_i32_1 = arith.constant 0 : i32
    return %c0_i32, %c0_i32_0 : i32, i32
  }
  func.func @transform_5(%arg0: i32) -> (i32, i32) {
    %c0_i32 = arith.constant 0 : i32
    %c0_i32_0 = arith.constant 0 : i32
    %c0_i32_1 = arith.constant 0 : i32
    return %c0_i32, %c0_i32_0 : i32, i32
  }
  func.func @transform_6(%arg0: i32) -> (i32, i32) {
    %c0_i32 = arith.constant 0 : i32
    %c0_i32_0 = arith.constant 0 : i32
    %c0_i32_1 = arith.constant 0 : i32
    return %c0_i32, %c0_i32_0 : i32, i32
  }
  func.func @transform_7(%arg0: i32) -> (i32, i32) {
    %c0_i32 = arith.constant 0 : i32
    %c0_i32_0 = arith.constant 0 : i32
    return %arg0, %c0_i32 : i32, i32
  }
}

</mosaic_0001>

<llo_original>
// kernel: net_forward.5
$region0: #{net_forward.5}
  #allocation0 [shape = 'u32[]', space=smem, size = 0x4, offset = 0x4, fixed_abs, tag = 'smem constant byte address 0x4 - core index']
  #allocation1 [shape = 'u32[144,128]{1,0:T(1,128)}', space=vmem, size = 0x12000, scoped, tag = 'internal scratch']
  %s0 = inlined_call_operand.vmem [shape: bf16[1792,128], index: 0, kind: input, shape index: {}]
  %s1 = inlined_call_operand.vmem [shape: bf16[128,128], index: 1, kind: input, shape index: {}]
  %s2 = inlined_call_operand.vmem [shape: f32[1,128], index: 2, kind: input, shape index: {}]
  %s3 = inlined_call_operand.vmem [shape: f32[1792,128], index: 3, kind: output, shape index: {}]
  %s4 = sld [smem:[#allocation0]]
  $region45: #{net_forward.5} parent=0
    _
  %s6 = ssub.s32 1, %s4
  %s7 = scalar_select 0, %s6, %s4
  loop: start=0, step=1, limit=9
  $region2: #{net_forward.5} parent=0 // loop_pre_header
    _
  $region3: #{net_forward.5} parent=0 // loop_header
    %s9 = sphi 0, %s13
    %p10 = scmp.ge.s32.totalorder %s9, 9
    %s19 = sphi 0, %s21
    %s22 = sphi 0, %s19
    %s23 = sphi 0, %s22
    %s39 = sphi 0, %s23
    %s43 = sphi 0, %s43
    %s45 = sphi 0, %s43
    %s46 = sphi 0, %s45
    %s60 = sphi 0, %s46
    %s64 = sphi 0, %s64
    %s66 = sphi 0, %s64
    %s67 = sphi 0, %s66
    %s81 = sphi 0, %s67
    %s87 = sphi 0, %s89
    %s90 = sphi 0, %s87
    %s91 = sphi 0, %s90
    %s107 = sphi 0, %s91
  $region4: #{net_forward.5} parent=0 // loop_header_branch
    %12 = sbr.rel (%p10) target = $region8
  $region5: #{net_forward.5} parent=0 // loop_body
    %s14 = ssub.s32 %s9, 1
    %s15 = ssub.s32 %s9, 2
    %s16 = sadd.s32 %s9, 1
    %s17 = ssub.s32 %s9, %s16
    %p18 = scmp.eq.s32.totalorder %s17, 0
    %s20 = sadd.s32 %s19, 1
    %s21 = scalar_select %p18, %s19, %s20
    %p24 = pneg %p18
    %p25 = scmp.eq.s32.totalorder %s9, 6
    %p26 = por %p24, %p25
    %p27 = scmp.ne.s32.totalorder %s19, %s22
    %p28 = scmp.eq.s32.totalorder %s9, 0
    %p29 = por %p27, %p28
    %p30 = scmp.ne.s32.totalorder %s19, %s22
    %p31 = scmp.eq.s32.totalorder %s14, 6
    %p32 = por %p30, %p31
    %p33 = scmp.ne.s32.totalorder %s22, %s23
    %p34 = scmp.eq.s32.totalorder %s14, 0
    %p35 = por %p33, %p34
    %p36 = scmp.ne.s32.totalorder %s22, %s23
    %p37 = scmp.eq.s32.totalorder %s15, 6
    %p38 = por %p36, %p37
    %p40 = scmp.ne.s32.totalorder %s23, %s39
    %p41 = scmp.eq.s32.totalorder %s15, 0
    %p42 = por %p40, %p41
    %s44 = sadd.s32 %s43, 1
    %p47 = scmp.eq.s32.totalorder %s9, 6
    %p48 = scmp.ne.s32.totalorder %s43, %s45
    %p49 = scmp.eq.s32.totalorder %s9, 0
    %p50 = por %p48, %p49
    %p51 = scmp.ne.s32.totalorder %s43, %s45
    %p52 = scmp.eq.s32.totalorder %s14, 6
    %p53 = por %p51, %p52
    %p54 = scmp.ne.s32.totalorder %s45, %s46
    %p55 = scmp.eq.s32.totalorder %s14, 0
    %p56 = por %p54, %p55
    %p57 = scmp.ne.s32.totalorder %s45, %s46
    %p58 = scmp.eq.s32.totalorder %s15, 6
    %p59 = por %p57, %p58
    %p61 = scmp.ne.s32.totalorder %s46, %s60
    %p62 = scmp.eq.s32.totalorder %s15, 0
    %p63 = por %p61, %p62
    %s65 = sadd.s32 %s64, 1
    %p68 = scmp.eq.s32.totalorder %s9, 6
    %p69 = scmp.ne.s32.totalorder %s64, %s66
    %p70 = scmp.eq.s32.totalorder %s9, 0
    %p71 = por %p69, %p70
    %p72 = scmp.ne.s32.totalorder %s64, %s66
    %p73 = scmp.eq.s32.totalorder %s14, 6
    %p74 = por %p72, %p73
    %p75 = scmp.ne.s32.totalorder %s66, %s67
    %p76 = scmp.eq.s32.totalorder %s14, 0
    %p77 = por %p75, %p76
    %p78 = scmp.ne.s32.totalorder %s66, %s67
    %p79 = scmp.eq.s32.totalorder %s15, 6
    %p80 = por %p78, %p79
    %p82 = scmp.ne.s32.totalorder %s67, %s81
    %p83 = scmp.eq.s32.totalorder %s15, 0
    %p84 = por %p82, %p83
    %s85 = ssub.s32 %s9, %s16
    %p86 = scmp.eq.s32.totalorder %s85, 0
    %s88 = sadd.s32 %s87, 1
    %s89 = scalar_select %p86, %s87, %s88
    %p92 = pneg %p86
    %p93 = scmp.eq.s32.totalorder %s9, 6
    %p94 = por %p92, %p93
    %p95 = scmp.ne.s32.totalorder %s87, %s90
    %p96 = scmp.eq.s32.totalorder %s9, 0
    %p97 = por %p95, %p96
    %p98 = scmp.ne.s32.totalorder %s87, %s90
    %p99 = scmp.eq.s32.totalorder %s14, 6
    %p100 = por %p98, %p99
    %p101 = scmp.ne.s32.totalorder %s90, %s91
    %p102 = scmp.eq.s32.totalorder %s14, 0
    %p103 = por %p101, %p102
    %p104 = scmp.ne.s32.totalorder %s90, %s91
    %p105 = scmp.eq.s32.totalorder %s15, 6
    %p106 = por %p104, %p105
    %p108 = scmp.ne.s32.totalorder %s91, %s107
    %p109 = scmp.eq.s32.totalorder %s15, 0
    %p110 = por %p108, %p109
    %p111 = scmp.le.s32.totalorder 1, %s9
    %p112 = scmp.lt.s32.totalorder %s9, 8
    %p113 = pnand %p111, %p112
    %p114 = pneg %p113
    // Predicated region
    $region9: #{net_forward.5} parent=5 // pred_check
      _
    $region10: #{net_forward.5} parent=5 // pred_check_branch
      %116 = sbr.rel (%p113) target = $region12
    $region11: #{net_forward.5} parent=5 // pred_region
      %s117 = ssub.s32 %s9, 1
      // Predicated region
      $region13: #{net_forward.5} parent=11 // pred_check
        %p118 = pneg %p56
      $region14: #{net_forward.5} parent=11 // pred_check_branch
        %120 = sbr.rel (%p118) target = $region16
      $region15: #{net_forward.5} parent=11 // pred_region
        _
      $region16: #{net_forward.5} parent=11 // pred_fallthru
        _
      // Predicated region
      $region17: #{net_forward.5} parent=11 // pred_check
        %p121 = pneg %p77
      $region18: #{net_forward.5} parent=11 // pred_check_branch
        %123 = sbr.rel (%p121) target = $region20
      $region19: #{net_forward.5} parent=11 // pred_region
        _
      $region20: #{net_forward.5} parent=11 // pred_fallthru
        _
    $region12: #{net_forward.5} parent=5 // pred_fallthru
      _
    %p124 = scmp.lt.s32.totalorder %s9, 7
    // Predicated region
    $region21: #{net_forward.5} parent=5 // pred_check
      %p125 = pneg %p124
    $region22: #{net_forward.5} parent=5 // pred_check_branch
      %127 = sbr.rel (%p125) target = $region24
    $region23: #{net_forward.5} parent=5 // pred_region
      // Predicated region
      $region25: #{net_forward.5} parent=23 // pred_check
        %p128 = pneg %p29
      $region26: #{net_forward.5} parent=23 // pred_check_branch
        %130 = sbr.rel (%p128) target = $region28
      $region27: #{net_forward.5} parent=23 // pred_region
        %s131 = smul.u32 32, %s9
        %p132 = scmp.lt.s32.totalorder %s131, 223
        %s133 = scalar_select %p132, %s131, 223
        %s134 = smul.addr %s133, 4
        %s135 = scalar_lea.vmem %s0, %s134
        %s136 = smul.u32 32, %s9
      $region28: #{net_forward.5} parent=23 // pred_fallthru
        _
    $region24: #{net_forward.5} parent=5 // pred_fallthru
      _
    %p137 = scmp.le.s32.totalorder 1, %s9
    %p138 = scmp.lt.s32.totalorder %s9, 8
    %p139 = pnand %p137, %p138
    %p140 = pneg %p139
    // Predicated region
    $region29: #{net_forward.5} parent=5 // pred_check
      _
    $region30: #{net_forward.5} parent=5 // pred_check_branch
      %142 = sbr.rel (%p139) target = $region32
    $region31: #{net_forward.5} parent=5 // pred_region
      %s143 = ssub.s32 %s9, 1
      %s144 = smul.u32 32, %s14
      %p145 = scmp.lt.s32.totalorder %s144, 223
      %s146 = scalar_select %p145, %s144, 223
      %s147 = smul.addr %s146, 4
      %s148 = scalar_lea.vmem %s0, %s147
      %p149 = pneg %p35
      %p150 = pneg %p32
      %p151 = pneg %p56
      %p152 = pneg %p53
      %p153 = pneg %p77
      %p154 = pneg %p74
      %p155 = pneg %p103
      %p156 = pneg %p100
      %s157 = smul.u32 32, %s14
      %p158 = scmp.lt.s32.totalorder %s157, 223
      %s159 = scalar_select %p158, %s157, 223
      %s160 = smul.addr %s159, 8
      %s161 = scalar_lea.vmem %s3, %s160
      %s162 = smul.u32 32, %s14
      %p163 = scmp.lt.s32.totalorder %s162, 223
      %s164 = scalar_select %p163, %s162, 223
      %s165 = smul.addr %s164, 4
      %s166 = scalar_lea.vmem %s0, %s165
      %s167 = smul.u32 32, %s14
      %s168 = smul.u32 32, %s14
      %p169 = scmp.lt.s32.totalorder %s168, 223
      %s170 = scalar_select %p169, %s168, 223
      %s171 = smul.addr %s170, 8
      %s172 = scalar_lea.vmem %s3, %s171
      %s173 = smul.u32 32, %s14
      %v175 = vld [vmem:[%s166] sm:$0xf]
      %v176 = vld [vmem:[%s166 + $0x4] sm:$0xf]
      %v177 = vld [vmem:[%s166 + $0x8] sm:$0xf]
      %v178 = vld [vmem:[%s166 + $0xc] sm:$0xf]
      %v179 = vld [vmem:[%s166 + $0x10] sm:$0xf]
      %v180 = vld [vmem:[%s166 + $0x14] sm:$0xf]
      %v181 = vld [vmem:[%s166 + $0x18] sm:$0xf]
      %v182 = vld [vmem:[%s166 + $0x1c] sm:$0xf]
      %v183 = vld [vmem:[%s166 + $0x20] sm:$0xf]
      %v184 = vld [vmem:[%s166 + $0x24] sm:$0xf]
      %v185 = vld [vmem:[%s166 + $0x28] sm:$0xf]
      %v186 = vld [vmem:[%s166 + $0x2c] sm:$0xf]
      %v187 = vld [vmem:[%s166 + $0x30] sm:$0xf]
      %v188 = vld [vmem:[%s166 + $0x34] sm:$0xf]
      %v189 = vld [vmem:[%s166 + $0x38] sm:$0xf]
      %v190 = vld [vmem:[%s166 + $0x3c] sm:$0xf]
      %v191 = vld [vmem:[%s166 + $0x40] sm:$0xf]
      %v192 = vld [vmem:[%s166 + $0x44] sm:$0xf]
      %v193 = vld [vmem:[%s166 + $0x48] sm:$0xf]
      %v194 = vld [vmem:[%s166 + $0x4c] sm:$0xf]
      %v195 = vld [vmem:[%s166 + $0x50] sm:$0xf]
      %v196 = vld [vmem:[%s166 + $0x54] sm:$0xf]
      %v197 = vld [vmem:[%s166 + $0x58] sm:$0xf]
      %v198 = vld [vmem:[%s166 + $0x5c] sm:$0xf]
      %v199 = vld [vmem:[%s166 + $0x60] sm:$0xf]
      %v200 = vld [vmem:[%s166 + $0x64] sm:$0xf]
      %v201 = vld [vmem:[%s166 + $0x68] sm:$0xf]
      %v202 = vld [vmem:[%s166 + $0x6c] sm:$0xf]
      %v203 = vld [vmem:[%s166 + $0x70] sm:$0xf]
      %v204 = vld [vmem:[%s166 + $0x74] sm:$0xf]
      %v205 = vld [vmem:[%s166 + $0x78] sm:$0xf]
      %v206 = vld [vmem:[%s166 + $0x7c] sm:$0xf]
      %v207 = vld [vmem:[%s1] sm:$0xf]
      %v208 = vld [vmem:[%s1 + $0x4] sm:$0xf]
      %v209 = vld [vmem:[%s1 + $0x8] sm:$0xf]
      %v210 = vld [vmem:[%s1 + $0xc] sm:$0xf]
      %v211 = vld [vmem:[%s1 + $0x10] sm:$0xf]
      %v212 = vld [vmem:[%s1 + $0x14] sm:$0xf]
      %v213 = vld [vmem:[%s1 + $0x18] sm:$0xf]
      %v214 = vld [vmem:[%s1 + $0x1c] sm:$0xf]
      %v215 = vld [vmem:[%s1 + $0x20] sm:$0xf]
      %v216 = vld [vmem:[%s1 + $0x24] sm:$0xf]
      %v217 = vld [vmem:[%s1 + $0x28] sm:$0xf]
      %v218 = vld [vmem:[%s1 + $0x2c] sm:$0xf]
      %v219 = vld [vmem:[%s1 + $0x30] sm:$0xf]
      %v220 = vld [vmem:[%s1 + $0x34] sm:$0xf]
      %v221 = vld [vmem:[%s1 + $0x38] sm:$0xf]
      %v222 = vld [vmem:[%s1 + $0x3c] sm:$0xf]
      %v223 = vld [vmem:[%s2] sm:$0x1]
      %v225 = vlaneseq
      %v226 = vshrl.u32 %v225, 7
      %v227 = vsub.s32 0, %v226
      %v228 = vrot.slane %v223, %v227
      %v262 = vunpack.c.l.b16 %v175
      %v263 = vunpack.c.l.b16 %v176
      %v264 = vunpack.c.l.b16 %v177
      %v265 = vunpack.c.l.b16 %v178
      %v266 = vunpack.c.l.b16 %v179
      %v267 = vunpack.c.l.b16 %v180
      %v268 = vunpack.c.l.b16 %v181
      %v269 = vunpack.c.l.b16 %v182
      %v270 = vunpack.c.l.b16 %v183
      %v271 = vunpack.c.l.b16 %v184
      %v272 = vunpack.c.l.b16 %v185
      %v273 = vunpack.c.l.b16 %v186
      %v274 = vunpack.c.l.b16 %v187
      %v275 = vunpack.c.l.b16 %v188
      %v276 = vunpack.c.l.b16 %v189
      %v277 = vunpack.c.l.b16 %v190
      %v278 = vunpack.c.l.b16 %v191
      %v279 = vunpack.c.l.b16 %v192
      %v280 = vunpack.c.l.b16 %v193
      %v281 = vunpack.c.l.b16 %v194
      %v282 = vunpack.c.l.b16 %v195
      %v283 = vunpack.c.l.b16 %v196
      %v284 = vunpack.c.l.b16 %v197
      %v285 = vunpack.c.l.b16 %v198
      %v286 = vunpack.c.l.b16 %v199
      %v287 = vunpack.c.l.b16 %v200
      %v288 = vunpack.c.l.b16 %v201
      %v289 = vunpack.c.l.b16 %v202
      %v290 = vunpack.c.l.b16 %v203
      %v291 = vunpack.c.l.b16 %v204
      %v292 = vunpack.c.l.b16 %v205
      %v293 = vunpack.c.l.b16 %v206
      %v294 = vpack.c.b16 %v263, %v262
      %v295 = vpack.c.b16 %v265, %v264
      %v296 = vpack.c.b16 %v267, %v266
      %v297 = vpack.c.b16 %v269, %v268
      %v298 = vpack.c.b16 %v271, %v270
      %v299 = vpack.c.b16 %v273, %v272
      %v300 = vpack.c.b16 %v275, %v274
      %v301 = vpack.c.b16 %v277, %v276
      %v302 = vpack.c.b16 %v279, %v278
      %v303 = vpack.c.b16 %v281, %v280
      %v304 = vpack.c.b16 %v283, %v282
      %v305 = vpack.c.b16 %v285, %v284
      %v306 = vpack.c.b16 %v287, %v286
      %v307 = vpack.c.b16 %v289, %v288
      %v308 = vpack.c.b16 %v291, %v290
      %v309 = vpack.c.b16 %v293, %v292
      %v342 = vunpack.c.l.b16 %v207
      %v343 = vunpack.c.l.b16 %v208
      %v344 = vunpack.c.l.b16 %v209
      %v345 = vunpack.c.l.b16 %v210
      %v346 = vunpack.c.l.b16 %v211
      %v347 = vunpack.c.l.b16 %v212
      %v348 = vunpack.c.l.b16 %v213
      %v349 = vunpack.c.l.b16 %v214
      %v350 = vunpack.c.l.b16 %v215
      %v351 = vunpack.c.l.b16 %v216
      %v352 = vunpack.c.l.b16 %v217
      %v353 = vunpack.c.l.b16 %v218
      %v354 = vunpack.c.l.b16 %v219
      %v355 = vunpack.c.l.b16 %v220
      %v356 = vunpack.c.l.b16 %v221
      %v357 = vunpack.c.l.b16 %v222
      %v358 = vpack.c.b16 %v343, %v342
      %v359 = vpack.c.b16 %v345, %v344
      %v360 = vpack.c.b16 %v347, %v346
      %v361 = vpack.c.b16 %v349, %v348
      %v362 = vpack.c.b16 %v351, %v350
      %v363 = vpack.c.b16 %v353, %v352
      %v364 = vpack.c.b16 %v355, %v354
      %v365 = vpack.c.b16 %v357, %v356
      %374 = vmatprep.subr.bf16.mxu0 0
      %375 = vmatpush1.bf16.msra.mxu0 %v358
      %376 = vmatprep.subr.bf16.mxu0 0
      %377 = vmatpush1.bf16.msra.mxu0 %v359
      %378 = vmatprep.subr.bf16.mxu0 0
      %379 = vmatpush1.bf16.msra.mxu0 %v360
      %380 = vmatprep.subr.bf16.mxu0 0
      %381 = vmatpush1.bf16.msra.mxu0 %v361
      %382 = vmatprep.subr.bf16.mxu0 0
      %383 = vmatpush1.bf16.msra.mxu0 %v362
      %384 = vmatprep.subr.bf16.mxu0 0
      %385 = vmatpush1.bf16.msra.mxu0 %v363
      %386 = vmatprep.subr.bf16.mxu0 0
      %387 = vmatpush1.bf16.msra.mxu0 %v364
      %388 = vmatprep.subr.bf16.mxu0 0
      %389 = vmatpush1.bf16.msra.mxu0 %v365
      %390 = vmatprep.subr.bf16.mxu0 0
      %391 = vmatpush1.bf16.msra.mxu0 0
      %392 = vmatprep.subr.bf16.mxu0 0
      %393 = vmatpush1.bf16.msra.mxu0 0
      %394 = vmatprep.subr.bf16.mxu0 0
      %395 = vmatpush1.bf16.msra.mxu0 0
      %396 = vmatprep.subr.bf16.mxu0 0
      %397 = vmatpush1.bf16.msra.mxu0 0
      %398 = vmatprep.subr.bf16.mxu0 0
      %399 = vmatpush1.bf16.msra.mxu0 0
      %400 = vmatprep.subr.bf16.mxu0 0
      %401 = vmatpush1.bf16.msra.mxu0 0
      %402 = vmatprep.subr.bf16.mxu0 0
      %403 = vmatpush1.bf16.msra.mxu0 0
      %404 = vmatprep.subr.bf16.mxu0 0
      %405 = vmatpush1.bf16.msra.mxu0 0
      %406 = vmatprep.mubr.bf16.mxu0 0
      %407 = vmatmul.mubr.bf16.gmra.mrb[0].mxu0 %v294
      %v408 = vpop.f32.mrb[0].mxu0
      %v409 = vadd.f32 %v228, %v408
      %v410 = vpop.f32.mrb[0].mxu0
      %v411 = vpop.f32.mrb[0].mxu0
      %v412 = vadd.f32 %v228, %v411
      %v413 = vpop.f32.mrb[0].mxu0
      %414 = vmatprep.mubr.bf16.mxu0 0
      %415 = vmatmul.mubr.bf16.gmra.mrb[0].mxu0 %v295
      %v416 = vpop.f32.mrb[0].mxu0
      %v417 = vadd.f32 %v228, %v416
      %v418 = vpop.f32.mrb[0].mxu0
      %v419 = vpop.f32.mrb[0].mxu0
      %v420 = vadd.f32 %v228, %v419
      %v421 = vpop.f32.mrb[0].mxu0
      %422 = vmatprep.mubr.bf16.mxu0 0
      %423 = vmatmul.mubr.bf16.gmra.mrb[0].mxu0 %v296
      %v424 = vpop.f32.mrb[0].mxu0
      %v425 = vadd.f32 %v228, %v424
      %v426 = vpop.f32.mrb[0].mxu0
      %v427 = vpop.f32.mrb[0].mxu0
      %v428 = vadd.f32 %v228, %v427
      %v429 = vpop.f32.mrb[0].mxu0
      %430 = vmatprep.mubr.bf16.mxu0 0
      %431 = vmatmul.mubr.bf16.gmra.mrb[0].mxu0 %v297
      %v432 = vpop.f32.mrb[0].mxu0
      %v433 = vadd.f32 %v228, %v432
      %v434 = vpop.f32.mrb[0].mxu0
      %v435 = vpop.f32.mrb[0].mxu0
      %v436 = vadd.f32 %v228, %v435
      %v437 = vpop.f32.mrb[0].mxu0
      %438 = vmatprep.mubr.bf16.mxu0 0
      %439 = vmatmul.mubr.bf16.gmra.mrb[0].mxu0 %v298
      %v440 = vpop.f32.mrb[0].mxu0
      %v441 = vadd.f32 %v228, %v440
      %v442 = vpop.f32.mrb[0].mxu0
      %v443 = vpop.f32.mrb[0].mxu0
      %v444 = vadd.f32 %v228, %v443
      %v445 = vpop.f32.mrb[0].mxu0
      %446 = vmatprep.mubr.bf16.mxu0 0
      %447 = vmatmul.mubr.bf16.gmra.mrb[0].mxu0 %v299
      %v448 = vpop.f32.mrb[0].mxu0
      %v449 = vadd.f32 %v228, %v448
      %v450 = vpop.f32.mrb[0].mxu0
      %v451 = vpop.f32.mrb[0].mxu0
      %v452 = vadd.f32 %v228, %v451
      %v453 = vpop.f32.mrb[0].mxu0
      %454 = vmatprep.mubr.bf16.mxu0 0
      %455 = vmatmul.mubr.bf16.gmra.mrb[0].mxu0 %v300
      %v456 = vpop.f32.mrb[0].mxu0
      %v457 = vadd.f32 %v228, %v456
      %v458 = vpop.f32.mrb[0].mxu0
      %v459 = vpop.f32.mrb[0].mxu0
      %v460 = vadd.f32 %v228, %v459
      %v461 = vpop.f32.mrb[0].mxu0
      %462 = vmatprep.mubr.bf16.mxu0 0
      %463 = vmatmul.mubr.bf16.gmra.mrb[0].mxu0 %v301
      %v464 = vpop.f32.mrb[0].mxu0
      %v465 = vadd.f32 %v228, %v464
      %v466 = vpop.f32.mrb[0].mxu0
      %v467 = vpop.f32.mrb[0].mxu0
      %v468 = vadd.f32 %v228, %v467
      %v469 = vpop.f32.mrb[0].mxu0
      %470 = vmatprep.mubr.bf16.mxu0 0
      %471 = vmatmul.mubr.bf16.gmra.mrb[0].mxu0 %v302
      %v472 = vpop.f32.mrb[0].mxu0
      %v473 = vadd.f32 %v228, %v472
      %v474 = vpop.f32.mrb[0].mxu0
      %v475 = vpop.f32.mrb[0].mxu0
      %v476 = vadd.f32 %v228, %v475
      %v477 = vpop.f32.mrb[0].mxu0
      %478 = vmatprep.mubr.bf16.mxu0 0
      %479 = vmatmul.mubr.bf16.gmra.mrb[0].mxu0 %v303
      %v480 = vpop.f32.mrb[0].mxu0
      %v481 = vadd.f32 %v228, %v480
      %v482 = vpop.f32.mrb[0].mxu0
      %v483 = vpop.f32.mrb[0].mxu0
      %v484 = vadd.f32 %v228, %v483
      %v485 = vpop.f32.mrb[0].mxu0
      %486 = vmatprep.mubr.bf16.mxu0 0
      %487 = vmatmul.mubr.bf16.gmra.mrb[0].mxu0 %v304
      %v488 = vpop.f32.mrb[0].mxu0
      %v489 = vadd.f32 %v228, %v488
      %v490 = vpop.f32.mrb[0].mxu0
      %v491 = vpop.f32.mrb[0].mxu0
      %v492 = vadd.f32 %v228, %v491
      %v493 = vpop.f32.mrb[0].mxu0
      %494 = vmatprep.mubr.bf16.mxu0 0
      %495 = vmatmul.mubr.bf16.gmra.mrb[0].mxu0 %v305
      %v496 = vpop.f32.mrb[0].mxu0
      %v497 = vadd.f32 %v228, %v496
      %v498 = vpop.f32.mrb[0].mxu0
      %v499 = vpop.f32.mrb[0].mxu0
      %v500 = vadd.f32 %v228, %v499
      %v501 = vpop.f32.mrb[0].mxu0
      %502 = vmatprep.mubr.bf16.mxu0 0
      %503 = vmatmul.mubr.bf16.gmra.mrb[0].mxu0 %v306
      %v504 = vpop.f32.mrb[0].mxu0
      %v505 = vadd.f32 %v228, %v504
      %v506 = vpop.f32.mrb[0].mxu0
      %v507 = vpop.f32.mrb[0].mxu0
      %v508 = vadd.f32 %v228, %v507
      %v509 = vpop.f32.mrb[0].mxu0
      %510 = vmatprep.mubr.bf16.mxu0 0
      %511 = vmatmul.mubr.bf16.gmra.mrb[0].mxu0 %v307
      %v512 = vpop.f32.mrb[0].mxu0
      %v513 = vadd.f32 %v228, %v512
      %v514 = vpop.f32.mrb[0].mxu0
      %v515 = vpop.f32.mrb[0].mxu0
      %v516 = vadd.f32 %v228, %v515
      %v517 = vpop.f32.mrb[0].mxu0
      %518 = vmatprep.mubr.bf16.mxu0 0
      %519 = vmatmul.mubr.bf16.gmra.mrb[0].mxu0 %v308
      %v520 = vpop.f32.mrb[0].mxu0
      %v521 = vadd.f32 %v228, %v520
      %v522 = vpop.f32.mrb[0].mxu0
      %v523 = vpop.f32.mrb[0].mxu0
      %v524 = vadd.f32 %v228, %v523
      %v525 = vpop.f32.mrb[0].mxu0
      %526 = vmatprep.mubr.bf16.mxu0 0
      %527 = vmatmul.mubr.bf16.gmra.mrb[0].mxu0 %v309
      %v528 = vpop.f32.mrb[0].mxu0
      %v529 = vadd.f32 %v228, %v528
      %v530 = vpop.f32.mrb[0].mxu0
      %v531 = vpop.f32.mrb[0].mxu0
      %v532 = vadd.f32 %v228, %v531
      %v533 = vpop.f32.mrb[0].mxu0
      %534 = vdwg.mxu0
      %v535 = vmax.f32 %v409, 0.0
      %v536 = vmax.f32 %v412, 0.0
      %v537 = vmax.f32 %v417, 0.0
      %v538 = vmax.f32 %v420, 0.0
      %v539 = vmax.f32 %v425, 0.0
      %v540 = vmax.f32 %v428, 0.0
      %v541 = vmax.f32 %v433, 0.0
      %v542 = vmax.f32 %v436, 0.0
      %v543 = vmax.f32 %v441, 0.0
      %v544 = vmax.f32 %v444, 0.0
      %v545 = vmax.f32 %v449, 0.0
      %v546 = vmax.f32 %v452, 0.0
      %v547 = vmax.f32 %v457, 0.0
      %v548 = vmax.f32 %v460, 0.0
      %v549 = vmax.f32 %v465, 0.0
      %v550 = vmax.f32 %v468, 0.0
      %v551 = vmax.f32 %v473, 0.0
      %v552 = vmax.f32 %v476, 0.0
      %v553 = vmax.f32 %v481, 0.0
      %v554 = vmax.f32 %v484, 0.0
      %v555 = vmax.f32 %v489, 0.0
      %v556 = vmax.f32 %v492, 0.0
      %v557 = vmax.f32 %v497, 0.0
      %v558 = vmax.f32 %v500, 0.0
      %v559 = vmax.f32 %v505, 0.0
      %v560 = vmax.f32 %v508, 0.0
      %v561 = vmax.f32 %v513, 0.0
      %v562 = vmax.f32 %v516, 0.0
      %v563 = vmax.f32 %v521, 0.0
      %v564 = vmax.f32 %v524, 0.0
      %v565 = vmax.f32 %v529, 0.0
      %v566 = vmax.f32 %v532, 0.0
      %567 = vst [vmem:[%s172] sm:$0xff] %v535
      %568 = vst [vmem:[%s172 + $0x8] sm:$0xff] %v536
      %569 = vst [vmem:[%s172 + $0x10] sm:$0xff] %v537
      %570 = vst [vmem:[%s172 + $0x18] sm:$0xff] %v538
      %571 = vst [vmem:[%s172 + $0x20] sm:$0xff] %v539
      %572 = vst [vmem:[%s172 + $0x28] sm:$0xff] %v540
      %573 = vst [vmem:[%s172 + $0x30] sm:$0xff] %v541
      %574 = vst [vmem:[%s172 + $0x38] sm:$0xff] %v542
      %575 = vst [vmem:[%s172 + $0x40] sm:$0xff] %v543
      %576 = vst [vmem:[%s172 + $0x48] sm:$0xff] %v544
      %577 = vst [vmem:[%s172 + $0x50] sm:$0xff] %v545
      %578 = vst [vmem:[%s172 + $0x58] sm:$0xff] %v546
      %579 = vst [vmem:[%s172 + $0x60] sm:$0xff] %v547
      %580 = vst [vmem:[%s172 + $0x68] sm:$0xff] %v548
      %581 = vst [vmem:[%s172 + $0x70] sm:$0xff] %v549
      %582 = vst [vmem:[%s172 + $0x78] sm:$0xff] %v550
      %583 = vst [vmem:[%s172 + $0x80] sm:$0xff] %v551
      %584 = vst [vmem:[%s172 + $0x88] sm:$0xff] %v552
      %585 = vst [vmem:[%s172 + $0x90] sm:$0xff] %v553
      %586 = vst [vmem:[%s172 + $0x98] sm:$0xff] %v554
      %587 = vst [vmem:[%s172 + $0xa0] sm:$0xff] %v555
      %588 = vst [vmem:[%s172 + $0xa8] sm:$0xff] %v556
      %589 = vst [vmem:[%s172 + $0xb0] sm:$0xff] %v557
      %590 = vst [vmem:[%s172 + $0xb8] sm:$0xff] %v558
      %591 = vst [vmem:[%s172 + $0xc0] sm:$0xff] %v559
      %592 = vst [vmem:[%s172 + $0xc8] sm:$0xff] %v560
      %593 = vst [vmem:[%s172 + $0xd0] sm:$0xff] %v561
      %594 = vst [vmem:[%s172 + $0xd8] sm:$0xff] %v562
      %595 = vst [vmem:[%s172 + $0xe0] sm:$0xff] %v563
      %596 = vst [vmem:[%s172 + $0xe8] sm:$0xff] %v564
      %597 = vst [vmem:[%s172 + $0xf0] sm:$0xff] %v565
      %598 = vst [vmem:[%s172 + $0xf8] sm:$0xff] %v566
      %s599 = smul.u32 32, %s14
      %p600 = scmp.lt.s32.totalorder %s599, 223
      %s601 = scalar_select %p600, %s599, 223
      %s602 = smul.addr %s601, 8
      %s603 = scalar_lea.vmem %s3, %s602
      // Predicated region
      $region33: #{net_forward.5} parent=31 // pred_check
        %p604 = pneg %p100
      $region34: #{net_forward.5} parent=31 // pred_check_branch
        %606 = sbr.rel (%p604) target = $region36
      $region35: #{net_forward.5} parent=31 // pred_region
        %s607 = smul.u32 32, %s14
      $region36: #{net_forward.5} parent=31 // pred_fallthru
        _
    $region32: #{net_forward.5} parent=5 // pred_fallthru
      _
    %p608 = scmp.le.s32.totalorder 2, %s9
    // Predicated region
    $region37: #{net_forward.5} parent=5 // pred_check
      %p609 = pneg %p608
    $region38: #{net_forward.5} parent=5 // pred_check_branch
      %611 = sbr.rel (%p609) target = $region40
    $region39: #{net_forward.5} parent=5 // pred_region
      %s612 = ssub.s32 %s9, 2
      // Predicated region
      $region41: #{net_forward.5} parent=39 // pred_check
        %p613 = pneg %p106
      $region42: #{net_forward.5} parent=39 // pred_check_branch
        %615 = sbr.rel (%p613) target = $region44
      $region43: #{net_forward.5} parent=39 // pred_region
        %s616 = smul.u32 32, %s15
        %p617 = scmp.lt.s32.totalorder %s616, 223
        %s618 = scalar_select %p617, %s616, 223
        %s619 = smul.addr %s618, 8
        %s620 = scalar_lea.vmem %s3, %s619
      $region44: #{net_forward.5} parent=39 // pred_fallthru
        _
    $region40: #{net_forward.5} parent=5 // pred_fallthru
      _
  $region6: #{net_forward.5} parent=0 // loop_footer
    %s13 = sadd.s32 1, %s9
  $region7: #{net_forward.5} parent=0 // loop_footer_branch
    %8 = sbr.rel target = $region3
  $region8: #{net_forward.5} parent=0 // loop_exit
    _

// kernel: net_forward.6
$region0: #{net_forward.6}
  #allocation0 [shape = 'u32[]', space=smem, size = 0x4, offset = 0x4, fixed_abs, tag = 'smem constant byte address 0x4 - core index']
  #allocation1 [shape = 'u32[144,128]{1,0:T(1,128)}', space=vmem, size = 0x12000, scoped, tag = 'internal scratch']
  %s0 = inlined_call_operand.vmem [shape: f32[24,128], index: 0, kind: input, shape index: {}]
  %s1 = inlined_call_operand.vmem [shape: f32[24,128], index: 1, kind: input, shape index: {}]
  %s2 = inlined_call_operand.vmem [shape: f32[24,128], index: 2, kind: input, shape index: {}]
  %s3 = inlined_call_operand.vmem [shape: f32[24,128], index: 3, kind: input, shape index: {}]
  %s4 = inlined_call_operand.vmem [shape: f32[24,128], index: 4, kind: output, shape index: {}]
  %s5 = sld [smem:[#allocation0]]
  $region26: #{net_forward.6} parent=0
    _
  %s7 = ssub.s32 1, %s5
  %s8 = scalar_select 0, %s7, %s5
  // Predicated region
  $region2: #{net_forward.6} parent=0 // pred_check
    _
  $region3: #{net_forward.6} parent=0 // pred_check_branch
    %10 = sbr.rel (0) target = $region5
  $region4: #{net_forward.6} parent=0 // pred_region
    _
  $region5: #{net_forward.6} parent=0 // pred_fallthru
    _
  // Predicated region
  $region6: #{net_forward.6} parent=0 // pred_check
    _
  $region7: #{net_forward.6} parent=0 // pred_check_branch
    %12 = sbr.rel (0) target = $region9
  $region8: #{net_forward.6} parent=0 // pred_region
    _
  $region9: #{net_forward.6} parent=0 // pred_fallthru
    _
  // Predicated region
  $region10: #{net_forward.6} parent=0 // pred_check
    _
  $region11: #{net_forward.6} parent=0 // pred_check_branch
    %14 = sbr.rel (0) target = $region13
  $region12: #{net_forward.6} parent=0 // pred_region
    _
  $region13: #{net_forward.6} parent=0 // pred_fallthru
    _
  // Predicated region
  $region14: #{net_forward.6} parent=0 // pred_check
    _
  $region15: #{net_forward.6} parent=0 // pred_check_branch
    %16 = sbr.rel (0) target = $region17
  $region16: #{net_forward.6} parent=0 // pred_region
    _
  $region17: #{net_forward.6} parent=0 // pred_fallthru
    _
  %v17 = vld [vmem:[%s0] sm:$0xff]
  %v18 = vld [vmem:[%s0 + $0x8] sm:$0xff]
  %v19 = vld [vmem:[%s0 + $0x10] sm:$0xff]
  %v20 = vld [vmem:[%s1] sm:$0xff]
  %v21 = vld [vmem:[%s1 + $0x8] sm:$0xff]
  %v22 = vld [vmem:[%s1 + $0x10] sm:$0xff]
  %v23 = vmax.f32 %v17, %v20
  %v24 = vmax.f32 %v18, %v21
  %v25 = vmax.f32 %v19, %v22
  %v26 = vld [vmem:[%s2] sm:$0xff]
  %v27 = vld [vmem:[%s2 + $0x8] sm:$0xff]
  %v28 = vld [vmem:[%s2 + $0x10] sm:$0xff]
  %v29 = vld [vmem:[%s3] sm:$0xff]
  %v30 = vld [vmem:[%s3 + $0x8] sm:$0xff]
  %v31 = vld [vmem:[%s3 + $0x10] sm:$0xff]
  %v32 = vmax.f32 %v26, %v29
  %v33 = vmax.f32 %v27, %v30
  %v34 = vmax.f32 %v28, %v31
  %v35 = vmax.f32 %v23, %v32
  %v36 = vmax.f32 %v24, %v33
  %v37 = vmax.f32 %v25, %v34
  %38 = vst [vmem:[%s4] sm:$0xff] %v35
  %39 = vst [vmem:[%s4 + $0x8] sm:$0xff] %v36
  %40 = vst [vmem:[%s4 + $0x10] sm:$0xff] %v37
  // Predicated region
  $region18: #{net_forward.6} parent=0 // pred_check
    _
  $region19: #{net_forward.6} parent=0 // pred_check_branch
    %42 = sbr.rel (0) target = $region21
  $region20: #{net_forward.6} parent=0 // pred_region
    _
  $region21: #{net_forward.6} parent=0 // pred_fallthru
    _
  // Predicated region
  $region22: #{net_forward.6} parent=0 // pred_check
    _
  $region23: #{net_forward.6} parent=0 // pred_check_branch
    %44 = sbr.rel (0) target = $region25
  $region24: #{net_forward.6} parent=0 // pred_region
    _
  $region25: #{net_forward.6} parent=0 // pred_fallthru
    _

// kernel: net_forward.7
$region0: #{net_forward.7}
  #allocation0 [shape = 'u32[]', space=smem, size = 0x4, offset = 0x4, fixed_abs, tag = 'smem constant byte address 0x4 - core index']
  #allocation1 [shape = 'u32[144,128]{1,0:T(1,128)}', space=vmem, size = 0x12000, scoped, tag = 'internal scratch']
  %s0 = inlined_call_operand.vmem [shape: bf16[256,256], index: 0, kind: input, shape index: {}]
  %s1 = inlined_call_operand.vmem [shape: bf16[256,128], index: 1, kind: input, shape index: {}]
  %s2 = inlined_call_operand.vmem [shape: f32[1,128], index: 2, kind: input, shape index: {}]
  %s3 = inlined_call_operand.vmem [shape: f32[256,128], index: 3, kind: output, shape index: {}]
  %s4 = sld [smem:[#allocation0]]
  $region22: #{net_forward.7} parent=0
    _
  %s6 = ssub.s32 1, %s4
  %s7 = scalar_select 0, %s6, %s4
  // Predicated region
  $region2: #{net_forward.7} parent=0 // pred_check
    _
  $region3: #{net_forward.7} parent=0 // pred_check_branch
    %9 = sbr.rel (0) target = $region5
  $region4: #{net_forward.7} parent=0 // pred_region
    _
  $region5: #{net_forward.7} parent=0 // pred_fallthru
    _
  // Predicated region
  $region6: #{net_forward.7} parent=0 // pred_check
    _
  $region7: #{net_forward.7} parent=0 // pred_check_branch
    %11 = sbr.rel (0) target = $region9
  $region8: #{net_forward.7} parent=0 // pred_region
    _
  $region9: #{net_forward.7} parent=0 // pred_fallthru
    _
  // Predicated region
  $region10: #{net_forward.7} parent=0 // pred_check
    _
  $region11: #{net_forward.7} parent=0 // pred_check_branch
    %13 = sbr.rel (0) target = $region13
  $region12: #{net_forward.7} parent=0 // pred_region
    _
  $region13: #{net_forward.7} parent=0 // pred_fallthru
    _
  %v15 = vld [vmem:[%s0] sm:$0xff]
  %v16 = vld [vmem:[%s0 + $0x8] sm:$0xff]
  %v17 = vld [vmem:[%s0 + $0x10] sm:$0xff]
  %v18 = vld [vmem:[%s0 + $0x18] sm:$0xff]
  %v19 = vld [vmem:[%s0 + $0x20] sm:$0xff]
  %v20 = vld [vmem:[%s0 + $0x28] sm:$0xff]
  %v21 = vld [vmem:[%s0 + $0x30] sm:$0xff]
  %v22 = vld [vmem:[%s0 + $0x38] sm:$0xff]
  %v23 = vld [vmem:[%s0 + $0x40] sm:$0xff]
  %v24 = vld [vmem:[%s0 + $0x48] sm:$0xff]
  %v25 = vld [vmem:[%s0 + $0x50] sm:$0xff]
  %v26 = vld [vmem:[%s0 + $0x58] sm:$0xff]
  %v27 = vld [vmem:[%s0 + $0x60] sm:$0xff]
  %v28 = vld [vmem:[%s0 + $0x68] sm:$0xff]
  %v29 = vld [vmem:[%s0 + $0x70] sm:$0xff]
  %v30 = vld [vmem:[%s0 + $0x78] sm:$0xff]
  %v31 = vld [vmem:[%s0 + $0x80] sm:$0xff]
  %v32 = vld [vmem:[%s0 + $0x88] sm:$0xff]
  %v33 = vld [vmem:[%s0 + $0x90] sm:$0xff]
  %v34 = vld [vmem:[%s0 + $0x98] sm:$0xff]
  %v35 = vld [vmem:[%s0 + $0xa0] sm:$0xff]
  %v36 = vld [vmem:[%s0 + $0xa8] sm:$0xff]
  %v37 = vld [vmem:[%s0 + $0xb0] sm:$0xff]
  %v38 = vld [vmem:[%s0 + $0xb8] sm:$0xff]
  %v39 = vld [vmem:[%s0 + $0xc0] sm:$0xff]
  %v40 = vld [vmem:[%s0 + $0xc8] sm:$0xff]
  %v41 = vld [vmem:[%s0 + $0xd0] sm:$0xff]
  %v42 = vld [vmem:[%s0 + $0xd8] sm:$0xff]
  %v43 = vld [vmem:[%s0 + $0xe0] sm:$0xff]
  %v44 = vld [vmem:[%s0 + $0xe8] sm:$0xff]
  %v45 = vld [vmem:[%s0 + $0xf0] sm:$0xff]
  %v46 = vld [vmem:[%s0 + $0xf8] sm:$0xff]
  %v47 = vld [vmem:[%s1] sm:$0xf]
  %v48 = vld [vmem:[%s1 + $0x4] sm:$0xf]
  %v49 = vld [vmem:[%s1 + $0x8] sm:$0xf]
  %v50 = vld [vmem:[%s1 + $0xc] sm:$0xf]
  %v51 = vld [vmem:[%s1 + $0x10] sm:$0xf]
  %v52 = vld [vmem:[%s1 + $0x14] sm:$0xf]
  %v53 = vld [vmem:[%s1 + $0x18] sm:$0xf]
  %v54 = vld [vmem:[%s1 + $0x1c] sm:$0xf]
  %v55 = vld [vmem:[%s1 + $0x20] sm:$0xf]
  %v56 = vld [vmem:[%s1 + $0x24] sm:$0xf]
  %v57 = vld [vmem:[%s1 + $0x28] sm:$0xf]
  %v58 = vld [vmem:[%s1 + $0x2c] sm:$0xf]
  %v59 = vld [vmem:[%s1 + $0x30] sm:$0xf]
  %v60 = vld [vmem:[%s1 + $0x34] sm:$0xf]
  %v61 = vld [vmem:[%s1 + $0x38] sm:$0xf]
  %v62 = vld [vmem:[%s1 + $0x3c] sm:$0xf]
  %v63 = vld [vmem:[%s1 + $0x40] sm:$0xf]
  %v64 = vld [vmem:[%s1 + $0x44] sm:$0xf]
  %v65 = vld [vmem:[%s1 + $0x48] sm:$0xf]
  %v66 = vld [vmem:[%s1 + $0x4c] sm:$0xf]
  %v67 = vld [vmem:[%s1 + $0x50] sm:$0xf]
  %v68 = vld [vmem:[%s1 + $0x54] sm:$0xf]
  %v69 = vld [vmem:[%s1 + $0x58] sm:$0xf]
  %v70 = vld [vmem:[%s1 + $0x5c] sm:$0xf]
  %v71 = vld [vmem:[%s1 + $0x60] sm:$0xf]
  %v72 = vld [vmem:[%s1 + $0x64] sm:$0xf]
  %v73 = vld [vmem:[%s1 + $0x68] sm:$0xf]
  %v74 = vld [vmem:[%s1 + $0x6c] sm:$0xf]
  %v75 = vld [vmem:[%s1 + $0x70] sm:$0xf]
  %v76 = vld [vmem:[%s1 + $0x74] sm:$0xf]
  %v77 = vld [vmem:[%s1 + $0x78] sm:$0xf]
  %v78 = vld [vmem:[%s1 + $0x7c] sm:$0xf]
  %v79 = vld [vmem:[%s2] sm:$0x1]
  %v81 = vlaneseq
  %v82 = vshrl.u32 %v81, 7
  %v83 = vsub.s32 0, %v82
  %v84 = vrot.slane %v79, %v83
  %v118 = vunpack.c.l.b16 %v15
  %v119 = vunpack.c.h.b16 %v15
  %v120 = vunpack.c.l.b16 %v16
  %v121 = vunpack.c.h.b16 %v16
  %v122 = vunpack.c.l.b16 %v17
  %v123 = vunpack.c.h.b16 %v17
  %v124 = vunpack.c.l.b16 %v18
  %v125 = vunpack.c.h.b16 %v18
  %v126 = vunpack.c.l.b16 %v19
  %v127 = vunpack.c.h.b16 %v19
  %v128 = vunpack.c.l.b16 %v20
  %v129 = vunpack.c.h.b16 %v20
  %v130 = vunpack.c.l.b16 %v21
  %v131 = vunpack.c.h.b16 %v21
  %v132 = vunpack.c.l.b16 %v22
  %v133 = vunpack.c.h.b16 %v22
  %v134 = vunpack.c.l.b16 %v23
  %v135 = vunpack.c.h.b16 %v23
  %v136 = vunpack.c.l.b16 %v24
  %v137 = vunpack.c.h.b16 %v24
  %v138 = vunpack.c.l.b16 %v25
  %v139 = vunpack.c.h.b16 %v25
  %v140 = vunpack.c.l.b16 %v26
  %v141 = vunpack.c.h.b16 %v26
  %v142 = vunpack.c.l.b16 %v27
  %v143 = vunpack.c.h.b16 %v27
  %v144 = vunpack.c.l.b16 %v28
  %v145 = vunpack.c.h.b16 %v28
  %v146 = vunpack.c.l.b16 %v29
  %v147 = vunpack.c.h.b16 %v29
  %v148 = vunpack.c.l.b16 %v30
  %v149 = vunpack.c.h.b16 %v30
  %v150 = vunpack.c.l.b16 %v31
  %v151 = vunpack.c.h.b16 %v31
  %v152 = vunpack.c.l.b16 %v32
  %v153 = vunpack.c.h.b16 %v32
  %v154 = vunpack.c.l.b16 %v33
  %v155 = vunpack.c.h.b16 %v33
  %v156 = vunpack.c.l.b16 %v34
  %v157 = vunpack.c.h.b16 %v34
  %v158 = vunpack.c.l.b16 %v35
  %v159 = vunpack.c.h.b16 %v35
  %v160 = vunpack.c.l.b16 %v36
  %v161 = vunpack.c.h.b16 %v36
  %v162 = vunpack.c.l.b16 %v37
  %v163 = vunpack.c.h.b16 %v37
  %v164 = vunpack.c.l.b16 %v38
  %v165 = vunpack.c.h.b16 %v38
  %v166 = vunpack.c.l.b16 %v39
  %v167 = vunpack.c.h.b16 %v39
  %v168 = vunpack.c.l.b16 %v40
  %v169 = vunpack.c.h.b16 %v40
  %v170 = vunpack.c.l.b16 %v41
  %v171 = vunpack.c.h.b16 %v41
  %v172 = vunpack.c.l.b16 %v42
  %v173 = vunpack.c.h.b16 %v42
  %v174 = vunpack.c.l.b16 %v43
  %v175 = vunpack.c.h.b16 %v43
  %v176 = vunpack.c.l.b16 %v44
  %v177 = vunpack.c.h.b16 %v44
  %v178 = vunpack.c.l.b16 %v45
  %v179 = vunpack.c.h.b16 %v45
  %v180 = vunpack.c.l.b16 %v46
  %v181 = vunpack.c.h.b16 %v46
  %v182 = vpack.c.b16 %v120, %v118
  %v183 = vpack.c.b16 %v121, %v119
  %v184 = vpack.c.b16 %v124, %v122
  %v185 = vpack.c.b16 %v125, %v123
  %v186 = vpack.c.b16 %v128, %v126
  %v187 = vpack.c.b16 %v129, %v127
  %v188 = vpack.c.b16 %v132, %v130
  %v189 = vpack.c.b16 %v133, %v131
  %v190 = vpack.c.b16 %v136, %v134
  %v191 = vpack.c.b16 %v137, %v135
  %v192 = vpack.c.b16 %v140, %v138
  %v193 = vpack.c.b16 %v141, %v139
  %v194 = vpack.c.b16 %v144, %v142
  %v195 = vpack.c.b16 %v145, %v143
  %v196 = vpack.c.b16 %v148, %v146
  %v197 = vpack.c.b16 %v149, %v147
  %v198 = vpack.c.b16 %v152, %v150
  %v199 = vpack.c.b16 %v153, %v151
  %v200 = vpack.c.b16 %v156, %v154
  %v201 = vpack.c.b16 %v157, %v155
  %v202 = vpack.c.b16 %v160, %v158
  %v203 = vpack.c.b16 %v161, %v159
  %v204 = vpack.c.b16 %v164, %v162
  %v205 = vpack.c.b16 %v165, %v163
  %v206 = vpack.c.b16 %v168, %v166
  %v207 = vpack.c.b16 %v169, %v167
  %v208 = vpack.c.b16 %v172, %v170
  %v209 = vpack.c.b16 %v173, %v171
  %v210 = vpack.c.b16 %v176, %v174
  %v211 = vpack.c.b16 %v177, %v175
  %v212 = vpack.c.b16 %v180, %v178
  %v213 = vpack.c.b16 %v181, %v179
  %v278 = vunpack.c.l.b16 %v47
  %v279 = vunpack.c.l.b16 %v48
  %v280 = vunpack.c.l.b16 %v49
  %v281 = vunpack.c.l.b16 %v50
  %v282 = vunpack.c.l.b16 %v51
  %v283 = vunpack.c.l.b16 %v52
  %v284 = vunpack.c.l.b16 %v53
  %v285 = vunpack.c.l.b16 %v54
  %v286 = vunpack.c.l.b16 %v55
  %v287 = vunpack.c.l.b16 %v56
  %v288 = vunpack.c.l.b16 %v57
  %v289 = vunpack.c.l.b16 %v58
  %v290 = vunpack.c.l.b16 %v59
  %v291 = vunpack.c.l.b16 %v60
  %v292 = vunpack.c.l.b16 %v61
  %v293 = vunpack.c.l.b16 %v62
  %v294 = vunpack.c.l.b16 %v63
  %v295 = vunpack.c.l.b16 %v64
  %v296 = vunpack.c.l.b16 %v65
  %v297 = vunpack.c.l.b16 %v66
  %v298 = vunpack.c.l.b16 %v67
  %v299 = vunpack.c.l.b16 %v68
  %v300 = vunpack.c.l.b16 %v69
  %v301 = vunpack.c.l.b16 %v70
  %v302 = vunpack.c.l.b16 %v71
  %v303 = vunpack.c.l.b16 %v72
  %v304 = vunpack.c.l.b16 %v73
  %v305 = vunpack.c.l.b16 %v74
  %v306 = vunpack.c.l.b16 %v75
  %v307 = vunpack.c.l.b16 %v76
  %v308 = vunpack.c.l.b16 %v77
  %v309 = vunpack.c.l.b16 %v78
  %v310 = vpack.c.b16 %v279, %v278
  %v311 = vpack.c.b16 %v281, %v280
  %v312 = vpack.c.b16 %v283, %v282
  %v313 = vpack.c.b16 %v285, %v284
  %v314 = vpack.c.b16 %v287, %v286
  %v315 = vpack.c.b16 %v289, %v288
  %v316 = vpack.c.b16 %v291, %v290
  %v317 = vpack.c.b16 %v293, %v292
  %v318 = vpack.c.b16 %v295, %v294
  %v319 = vpack.c.b16 %v297, %v296
  %v320 = vpack.c.b16 %v299, %v298
  %v321 = vpack.c.b16 %v301, %v300
  %v322 = vpack.c.b16 %v303, %v302
  %v323 = vpack.c.b16 %v305, %v304
  %v324 = vpack.c.b16 %v307, %v306
  %v325 = vpack.c.b16 %v309, %v308
  %342 = vmatprep.subr.bf16.mxu0 0
  %343 = vmatpush1.bf16.msra.mxu0 %v310
  %344 = vmatprep.subr.bf16.mxu0 0
  %345 = vmatpush1.bf16.msra.mxu0 %v311
  %346 = vmatprep.subr.bf16.mxu0 0
  %347 = vmatpush1.bf16.msra.mxu0 %v312
  %348 = vmatprep.subr.bf16.mxu0 0
  %349 = vmatpush1.bf16.msra.mxu0 %v313
  %350 = vmatprep.subr.bf16.mxu0 0
  %351 = vmatpush1.bf16.msra.mxu0 %v314
  %352 = vmatprep.subr.bf16.mxu0 0
  %353 = vmatpush1.bf16.msra.mxu0 %v315
  %354 = vmatprep.subr.bf16.mxu0 0
  %355 = vmatpush1.bf16.msra.mxu0 %v316
  %356 = vmatprep.subr.bf16.mxu0 0
  %357 = vmatpush1.bf16.msra.mxu0 %v317
  %358 = vmatprep.subr.bf16.mxu0 0
  %359 = vmatpush1.bf16.msra.mxu0 %v318
  %360 = vmatprep.subr.bf16.mxu0 0
  %361 = vmatpush1.bf16.msra.mxu0 %v319
  %362 = vmatprep.subr.bf16.mxu0 0
  %363 = vmatpush1.bf16.msra.mxu0 %v320
  %364 = vmatprep.subr.bf16.mxu0 0
  %365 = vmatpush1.bf16.msra.mxu0 %v321
  %366 = vmatprep.subr.bf16.mxu0 0
  %367 = vmatpush1.bf16.msra.mxu0 %v322
  %368 = vmatprep.subr.bf16.mxu0 0
  %369 = vmatpush1.bf16.msra.mxu0 %v323
  %370 = vmatprep.subr.bf16.mxu0 0
  %371 = vmatpush1.bf16.msra.mxu0 %v324
  %372 = vmatprep.subr.bf16.mxu0 0
  %373 = vmatpush1.bf16.msra.mxu0 %v325
  %374 = vmatprep.mubr.bf16.mxu0 %v183
  %375 = vmatmul.mubr.bf16.gmra.mrb[0].mxu0 %v182
  %v376 = vpop.f32.mrb[0].mxu0
  %v377 = vadd.f32 %v84, %v376
  %v378 = vpop.f32.mrb[0].mxu0
  %v379 = vpop.f32.mrb[0].mxu0
  %v380 = vadd.f32 %v84, %v379
  %v381 = vpop.f32.mrb[0].mxu0
  %382 = vmatprep.mubr.bf16.mxu0 %v185
  %383 = vmatmul.mubr.bf16.gmra.mrb[0].mxu0 %v184
  %v384 = vpop.f32.mrb[0].mxu0
  %v385 = vadd.f32 %v84, %v384
  %v386 = vpop.f32.mrb[0].mxu0
  %v387 = vpop.f32.mrb[0].mxu0
  %v388 = vadd.f32 %v84, %v387
  %v389 = vpop.f32.mrb[0].mxu0
  %390 = vmatprep.mubr.bf16.mxu0 %v187
  %391 = vmatmul.mubr.bf16.gmra.mrb[0].mxu0 %v186
  %v392 = vpop.f32.mrb[0].mxu0
  %v393 = vadd.f32 %v84, %v392
  %v394 = vpop.f32.mrb[0].mxu0
  %v395 = vpop.f32.mrb[0].mxu0
  %v396 = vadd.f32 %v84, %v395
  %v397 = vpop.f32.mrb[0].mxu0
  %398 = vmatprep.mubr.bf16.mxu0 %v189
  %399 = vmatmul.mubr.bf16.gmra.mrb[0].mxu0 %v188
  %v400 = vpop.f32.mrb[0].mxu0
  %v401 = vadd.f32 %v84, %v400
  %v402 = vpop.f32.mrb[0].mxu0
  %v403 = vpop.f32.mrb[0].mxu0
  %v404 = vadd.f32 %v84, %v403
  %v405 = vpop.f32.mrb[0].mxu0
  %406 = vmatprep.mubr.bf16.mxu0 %v191
  %407 = vmatmul.mubr.bf16.gmra.mrb[0].mxu0 %v190
  %v408 = vpop.f32.mrb[0].mxu0
  %v409 = vadd.f32 %v84, %v408
  %v410 = vpop.f32.mrb[0].mxu0
  %v411 = vpop.f32.mrb[0].mxu0
  %v412 = vadd.f32 %v84, %v411
  %v413 = vpop.f32.mrb[0].mxu0
  %414 = vmatprep.mubr.bf16.mxu0 %v193
  %415 = vmatmul.mubr.bf16.gmra.mrb[0].mxu0 %v192
  %v416 = vpop.f32.mrb[0].mxu0
  %v417 = vadd.f32 %v84, %v416
  %v418 = vpop.f32.mrb[0].mxu0
  %v419 = vpop.f32.mrb[0].mxu0
  %v420 = vadd.f32 %v84, %v419
  %v421 = vpop.f32.mrb[0].mxu0
  %422 = vmatprep.mubr.bf16.mxu0 %v195
  %423 = vmatmul.mubr.bf16.gmra.mrb[0].mxu0 %v194
  %v424 = vpop.f32.mrb[0].mxu0
  %v425 = vadd.f32 %v84, %v424
  %v426 = vpop.f32.mrb[0].mxu0
  %v427 = vpop.f32.mrb[0].mxu0
  %v428 = vadd.f32 %v84, %v427
  %v429 = vpop.f32.mrb[0].mxu0
  %430 = vmatprep.mubr.bf16.mxu0 %v197
  %431 = vmatmul.mubr.bf16.gmra.mrb[0].mxu0 %v196
  %v432 = vpop.f32.mrb[0].mxu0
  %v433 = vadd.f32 %v84, %v432
  %v434 = vpop.f32.mrb[0].mxu0
  %v435 = vpop.f32.mrb[0].mxu0
  %v436 = vadd.f32 %v84, %v435
  %v437 = vpop.f32.mrb[0].mxu0
  %438 = vmatprep.mubr.bf16.mxu0 %v199
  %439 = vmatmul.mubr.bf16.gmra.mrb[0].mxu0 %v198
  %v440 = vpop.f32.mrb[0].mxu0
  %v441 = vadd.f32 %v84, %v440
  %v442 = vpop.f32.mrb[0].mxu0
  %v443 = vpop.f32.mrb[0].mxu0
  %v444 = vadd.f32 %v84, %v443
  %v445 = vpop.f32.mrb[0].mxu0
  %446 = vmatprep.mubr.bf16.mxu0 %v201
  %447 = vmatmul.mubr.bf16.gmra.mrb[0].mxu0 %v200
  %v448 = vpop.f32.mrb[0].mxu0
  %v449 = vadd.f32 %v84, %v448
  %v450 = vpop.f32.mrb[0].mxu0
  %v451 = vpop.f32.mrb[0].mxu0
  %v452 = vadd.f32 %v84, %v451
  %v453 = vpop.f32.mrb[0].mxu0
  %454 = vmatprep.mubr.bf16.mxu0 %v203
  %455 = vmatmul.mubr.bf16.gmra.mrb[0].mxu0 %v202
  %v456 = vpop.f32.mrb[0].mxu0
  %v457 = vadd.f32 %v84, %v456
  %v458 = vpop.f32.mrb[0].mxu0
  %v459 = vpop.f32.mrb[0].mxu0
  %v460 = vadd.f32 %v84, %v459
  %v461 = vpop.f32.mrb[0].mxu0
  %462 = vmatprep.mubr.bf16.mxu0 %v205
  %463 = vmatmul.mubr.bf16.gmra.mrb[0].mxu0 %v204
  %v464 = vpop.f32.mrb[0].mxu0
  %v465 = vadd.f32 %v84, %v464
  %v466 = vpop.f32.mrb[0].mxu0
  %v467 = vpop.f32.mrb[0].mxu0
  %v468 = vadd.f32 %v84, %v467
  %v469 = vpop.f32.mrb[0].mxu0
  %470 = vmatprep.mubr.bf16.mxu0 %v207
  %471 = vmatmul.mubr.bf16.gmra.mrb[0].mxu0 %v206
  %v472 = vpop.f32.mrb[0].mxu0
  %v473 = vadd.f32 %v84, %v472
  %v474 = vpop.f32.mrb[0].mxu0
  %v475 = vpop.f32.mrb[0].mxu0
  %v476 = vadd.f32 %v84, %v475
  %v477 = vpop.f32.mrb[0].mxu0
  %478 = vmatprep.mubr.bf16.mxu0 %v209
  %479 = vmatmul.mubr.bf16.gmra.mrb[0].mxu0 %v208
  %v480 = vpop.f32.mrb[0].mxu0
  %v481 = vadd.f32 %v84, %v480
  %v482 = vpop.f32.mrb[0].mxu0
  %v483 = vpop.f32.mrb[0].mxu0
  %v484 = vadd.f32 %v84, %v483
  %v485 = vpop.f32.mrb[0].mxu0
  %486 = vmatprep.mubr.bf16.mxu0 %v211
  %487 = vmatmul.mubr.bf16.gmra.mrb[0].mxu0 %v210
  %v488 = vpop.f32.mrb[0].mxu0
  %v489 = vadd.f32 %v84, %v488
  %v490 = vpop.f32.mrb[0].mxu0
  %v491 = vpop.f32.mrb[0].mxu0
  %v492 = vadd.f32 %v84, %v491
  %v493 = vpop.f32.mrb[0].mxu0
  %494 = vmatprep.mubr.bf16.mxu0 %v213
  %495 = vmatmul.mubr.bf16.gmra.mrb[0].mxu0 %v212
  %v496 = vpop.f32.mrb[0].mxu0
  %v497 = vadd.f32 %v84, %v496
  %v498 = vpop.f32.mrb[0].mxu0
  %v499 = vpop.f32.mrb[0].mxu0
  %v500 = vadd.f32 %v84, %v499
  %v501 = vpop.f32.mrb[0].mxu0
  %502 = vdwg.mxu0
  %v503 = vmax.f32 %v377, 0.0
  %v504 = vmax.f32 %v380, 0.0
  %v505 = vmax.f32 %v385, 0.0
  %v506 = vmax.f32 %v388, 0.0
  %v507 = vmax.f32 %v393, 0.0
  %v508 = vmax.f32 %v396, 0.0
  %v509 = vmax.f32 %v401, 0.0
  %v510 = vmax.f32 %v404, 0.0
  %v511 = vmax.f32 %v409, 0.0
  %v512 = vmax.f32 %v412, 0.0
  %v513 = vmax.f32 %v417, 0.0
  %v514 = vmax.f32 %v420, 0.0
  %v515 = vmax.f32 %v425, 0.0
  %v516 = vmax.f32 %v428, 0.0
  %v517 = vmax.f32 %v433, 0.0
  %v518 = vmax.f32 %v436, 0.0
  %v519 = vmax.f32 %v441, 0.0
  %v520 = vmax.f32 %v444, 0.0
  %v521 = vmax.f32 %v449, 0.0
  %v522 = vmax.f32 %v452, 0.0
  %v523 = vmax.f32 %v457, 0.0
  %v524 = vmax.f32 %v460, 0.0
  %v525 = vmax.f32 %v465, 0.0
  %v526 = vmax.f32 %v468, 0.0
  %v527 = vmax.f32 %v473, 0.0
  %v528 = vmax.f32 %v476, 0.0
  %v529 = vmax.f32 %v481, 0.0
  %v530 = vmax.f32 %v484, 0.0
  %v531 = vmax.f32 %v489, 0.0
  %v532 = vmax.f32 %v492, 0.0
  %v533 = vmax.f32 %v497, 0.0
  %v534 = vmax.f32 %v500, 0.0
  %535 = vst [vmem:[%s3] sm:$0xff] %v503
  %536 = vst [vmem:[%s3 + $0x8] sm:$0xff] %v504
  %537 = vst [vmem:[%s3 + $0x10] sm:$0xff] %v505
  %538 = vst [vmem:[%s3 + $0x18] sm:$0xff] %v506
  %539 = vst [vmem:[%s3 + $0x20] sm:$0xff] %v507
  %540 = vst [vmem:[%s3 + $0x28] sm:$0xff] %v508
  %541 = vst [vmem:[%s3 + $0x30] sm:$0xff] %v509
  %542 = vst [vmem:[%s3 + $0x38] sm:$0xff] %v510
  %543 = vst [vmem:[%s3 + $0x40] sm:$0xff] %v511
  %544 = vst [vmem:[%s3 + $0x48] sm:$0xff] %v512
  %545 = vst [vmem:[%s3 + $0x50] sm:$0xff] %v513
  %546 = vst [vmem:[%s3 + $0x58] sm:$0xff] %v514
  %547 = vst [vmem:[%s3 + $0x60] sm:$0xff] %v515
  %548 = vst [vmem:[%s3 + $0x68] sm:$0xff] %v516
  %549 = vst [vmem:[%s3 + $0x70] sm:$0xff] %v517
  %550 = vst [vmem:[%s3 + $0x78] sm:$0xff] %v518
  %551 = vst [vmem:[%s3 + $0x80] sm:$0xff] %v519
  %552 = vst [vmem:[%s3 + $0x88] sm:$0xff] %v520
  %553 = vst [vmem:[%s3 + $0x90] sm:$0xff] %v521
  %554 = vst [vmem:[%s3 + $0x98] sm:$0xff] %v522
  %555 = vst [vmem:[%s3 + $0xa0] sm:$0xff] %v523
  %556 = vst [vmem:[%s3 + $0xa8] sm:$0xff] %v524
  %557 = vst [vmem:[%s3 + $0xb0] sm:$0xff] %v525
  %558 = vst [vmem:[%s3 + $0xb8] sm:$0xff] %v526
  %559 = vst [vmem:[%s3 + $0xc0] sm:$0xff] %v527
  %560 = vst [vmem:[%s3 + $0xc8] sm:$0xff] %v528
  %561 = vst [vmem:[%s3 + $0xd0] sm:$0xff] %v529
  %562 = vst [vmem:[%s3 + $0xd8] sm:$0xff] %v530
  %563 = vst [vmem:[%s3 + $0xe0] sm:$0xff] %v531
  %564 = vst [vmem:[%s3 + $0xe8] sm:$0xff] %v532
  %565 = vst [vmem:[%s3 + $0xf0] sm:$0xff] %v533
  %566 = vst [vmem:[%s3 + $0xf8] sm:$0xff] %v534
  // Predicated region
  $region14: #{net_forward.7} parent=0 // pred_check
    _
  $region15: #{net_forward.7} parent=0 // pred_check_branch
    %568 = sbr.rel (0) target = $region17
  $region16: #{net_forward.7} parent=0 // pred_region
    _
  $region17: #{net_forward.7} parent=0 // pred_fallthru
    _
  // Predicated region
  $region18: #{net_forward.7} parent=0 // pred_check
    _
  $region19: #{net_forward.7} parent=0 // pred_check_branch
    %570 = sbr.rel (0) target = $region21
  $region20: #{net_forward.7} parent=0 // pred_region
    _
  $region21: #{net_forward.7} parent=0 // pred_fallthru
    _

// kernel: net_forward.8
$region0: #{net_forward.8}
  #allocation0 [shape = 'u32[]', space=smem, size = 0x4, offset = 0x4, fixed_abs, tag = 'smem constant byte address 0x4 - core index']
  #allocation1 [shape = 'u32[144,128]{1,0:T(1,128)}', space=vmem, size = 0x12000, scoped, tag = 'internal scratch']
  %s0 = inlined_call_operand.vmem [shape: f32[8,128], index: 0, kind: input, shape index: {}]
  %s1 = inlined_call_operand.vmem [shape: f32[8,128], index: 1, kind: input, shape index: {}]
  %s2 = inlined_call_operand.vmem [shape: f32[8,128], index: 2, kind: input, shape index: {}]
  %s3 = inlined_call_operand.vmem [shape: f32[8,128], index: 3, kind: input, shape index: {}]
  %s4 = inlined_call_operand.vmem [shape: f32[8,128], index: 4, kind: output, shape index: {}]
  %s5 = sld [smem:[#allocation0]]
  $region26: #{net_forward.8} parent=0
    _
  %s7 = ssub.s32 1, %s5
  %s8 = scalar_select 0, %s7, %s5
  // Predicated region
  $region2: #{net_forward.8} parent=0 // pred_check
    _
  $region3: #{net_forward.8} parent=0 // pred_check_branch
    %10 = sbr.rel (0) target = $region5
  $region4: #{net_forward.8} parent=0 // pred_region
    _
  $region5: #{net_forward.8} parent=0 // pred_fallthru
    _
  // Predicated region
  $region6: #{net_forward.8} parent=0 // pred_check
    _
  $region7: #{net_forward.8} parent=0 // pred_check_branch
    %12 = sbr.rel (0) target = $region9
  $region8: #{net_forward.8} parent=0 // pred_region
    _
  $region9: #{net_forward.8} parent=0 // pred_fallthru
    _
  // Predicated region
  $region10: #{net_forward.8} parent=0 // pred_check
    _
  $region11: #{net_forward.8} parent=0 // pred_check_branch
    %14 = sbr.rel (0) target = $region13
  $region12: #{net_forward.8} parent=0 // pred_region
    _
  $region13: #{net_forward.8} parent=0 // pred_fallthru
    _
  // Predicated region
  $region14: #{net_forward.8} parent=0 // pred_check
    _
  $region15: #{net_forward.8} parent=0 // pred_check_branch
    %16 = sbr.rel (0) target = $region17
  $region16: #{net_forward.8} parent=0 // pred_region
    _
  $region17: #{net_forward.8} parent=0 // pred_fallthru
    _
  %v17 = vld [vmem:[%s0] sm:$0xff]
  %v18 = vld [vmem:[%s1] sm:$0xff]
  %v19 = vmax.f32 %v17, %v18
  %v20 = vld [vmem:[%s2] sm:$0xff]
  %v21 = vld [vmem:[%s3] sm:$0xff]
  %v22 = vmax.f32 %v20, %v21
  %v23 = vmax.f32 %v19, %v22
  %24 = vst [vmem:[%s4] sm:$0xff] %v23
  // Predicated region
  $region18: #{net_forward.8} parent=0 // pred_check
    _
  $region19: #{net_forward.8} parent=0 // pred_check_branch
    %26 = sbr.rel (0) target = $region21
  $region20: #{net_forward.8} parent=0 // pred_region
    _
  $region21: #{net_forward.8} parent=0 // pred_fallthru
    _
  // Predicated region
  $region22: #{net_forward.8} parent=0 // pred_check
    _
  $region23: #{net_forward.8} parent=0 // pred_check_branch
    %28 = sbr.rel (0) target = $region25
  $region24: #{net_forward.8} parent=0 // pred_region
    _
  $region25: #{net_forward.8} parent=0 // pred_fallthru
    _

// kernel: net_forward.9
$region0: #{net_forward.9}
  #allocation0 [shape = 'u32[]', space=smem, size = 0x4, offset = 0x4, fixed_abs, tag = 'smem constant byte address 0x4 - core index']
  #allocation1 [shape = 'u32[144,128]{1,0:T(1,128)}', space=vmem, size = 0x12000, scoped, tag = 'internal scratch']
  %s0 = inlined_call_operand.vmem [shape: bf16[16,512], index: 0, kind: input, shape index: {}]
  %s1 = inlined_call_operand.vmem [shape: bf16[512,128], index: 1, kind: input, shape index: {}]
  %s2 = inlined_call_operand.vmem [shape: f32[1,128], index: 2, kind: input, shape index: {}]
  %s3 = inlined_call_operand.vmem [shape: bf16[128,128], index: 3, kind: input, shape index: {}]
  %s4 = inlined_call_operand.vmem [shape: f32[1,128], index: 4, kind: input, shape index: {}]
  %s5 = inlined_call_operand.vmem [shape: bf16[128,128], index: 5, kind: input, shape index: {}]
  %s6 = inlined_call_operand.vmem [shape: f32[1,128], index: 6, kind: input, shape index: {}]
  %s7 = inlined_call_operand.vmem [shape: f32[16,128], index: 7, kind: output, shape index: {}]
  %s8 = sld [smem:[#allocation0]]
  $region38: #{net_forward.9} parent=0
    _
  %s10 = ssub.s32 1, %s8
  %s11 = scalar_select 0, %s10, %s8
  // Predicated region
  $region2: #{net_forward.9} parent=0 // pred_check
    _
  $region3: #{net_forward.9} parent=0 // pred_check_branch
    %13 = sbr.rel (0) target = $region5
  $region4: #{net_forward.9} parent=0 // pred_region
    _
  $region5: #{net_forward.9} parent=0 // pred_fallthru
    _
  // Predicated region
  $region6: #{net_forward.9} parent=0 // pred_check
    _
  $region7: #{net_forward.9} parent=0 // pred_check_branch
    %15 = sbr.rel (0) target = $region9
  $region8: #{net_forward.9} parent=0 // pred_region
    _
  $region9: #{net_forward.9} parent=0 // pred_fallthru
    _
  // Predicated region
  $region10: #{net_forward.9} parent=0 // pred_check
    _
  $region11: #{net_forward.9} parent=0 // pred_check_branch
    %17 = sbr.rel (0) target = $region13
  $region12: #{net_forward.9} parent=0 // pred_region
    _
  $region13: #{net_forward.9} parent=0 // pred_fallthru
    _
  // Predicated region
  $region14: #{net_forward.9} parent=0 // pred_check
    _
  $region15: #{net_forward.9} parent=0 // pred_check_branch
    %19 = sbr.rel (0) target = $region17
  $region16: #{net_forward.9} parent=0 // pred_region
    _
  $region17: #{net_forward.9} parent=0 // pred_fallthru
    _
  // Predicated region
  $region18: #{net_forward.9} parent=0 // pred_check
    _
  $region19: #{net_forward.9} parent=0 // pred_check_branch
    %21 = sbr.rel (0) target = $region21
  $region20: #{net_forward.9} parent=0 // pred_region
    _
  $region21: #{net_forward.9} parent=0 // pred_fallthru
    _
  // Predicated region
  $region22: #{net_forward.9} parent=0 // pred_check
    _
  $region23: #{net_forward.9} parent=0 // pred_check_branch
    %23 = sbr.rel (0) target = $region25
  $region24: #{net_forward.9} parent=0 // pred_region
    _
  $region25: #{net_forward.9} parent=0 // pred_fallthru
    _
  // Predicated region
  $region26: #{net_forward.9} parent=0 // pred_check
    _
  $region27: #{net_forward.9} parent=0 // pred_check_branch
    %25 = sbr.rel (0) target = $region29
  $region28: #{net_forward.9} parent=0 // pred_region
    _
  $region29: #{net_forward.9} parent=0 // pred_fallthru
    _
  %v27 = vld [vmem:[%s0] sm:$0xff]
  %v28 = vld [vmem:[%s0 + $0x8] sm:$0xff]
  %v29 = vld [vmem:[%s0 + $0x10] sm:$0xff]
  %v30 = vld [vmem:[%s0 + $0x18] sm:$0xff]
  %v31 = vld [vmem:[%s1] sm:$0xf]
  %v32 = vld [vmem:[%s1 + $0x4] sm:$0xf]
  %v33 = vld [vmem:[%s1 + $0x8] sm:$0xf]
  %v34 = vld [vmem:[%s1 + $0xc] sm:$0xf]
  %v35 = vld [vmem:[%s1 + $0x10] sm:$0xf]
  %v36 = vld [vmem:[%s1 + $0x14] sm:$0xf]
  %v37 = vld [vmem:[%s1 + $0x18] sm:$0xf]
  %v38 = vld [vmem:[%s1 + $0x1c] sm:$0xf]
  %v39 = vld [vmem:[%s1 + $0x20] sm:$0xf]
  %v40 = vld [vmem:[%s1 + $0x24] sm:$0xf]
  %v41 = vld [vmem:[%s1 + $0x28] sm:$0xf]
  %v42 = vld [vmem:[%s1 + $0x2c] sm:$0xf]
  %v43 = vld [vmem:[%s1 + $0x30] sm:$0xf]
  %v44 = vld [vmem:[%s1 + $0x34] sm:$0xf]
  %v45 = vld [vmem:[%s1 + $0x38] sm:$0xf]
  %v46 = vld [vmem:[%s1 + $0x3c] sm:$0xf]
  %v47 = vld [vmem:[%s1 + $0x40] sm:$0xf]
  %v48 = vld [vmem:[%s1 + $0x44] sm:$0xf]
  %v49 = vld [vmem:[%s1 + $0x48] sm:$0xf]
  %v50 = vld [vmem:[%s1 + $0x4c] sm:$0xf]
  %v51 = vld [vmem:[%s1 + $0x50] sm:$0xf]
  %v52 = vld [vmem:[%s1 + $0x54] sm:$0xf]
  %v53 = vld [vmem:[%s1 + $0x58] sm:$0xf]
  %v54 = vld [vmem:[%s1 + $0x5c] sm:$0xf]
  %v55 = vld [vmem:[%s1 + $0x60] sm:$0xf]
  %v56 = vld [vmem:[%s1 + $0x64] sm:$0xf]
  %v57 = vld [vmem:[%s1 + $0x68] sm:$0xf]
  %v58 = vld [vmem:[%s1 + $0x6c] sm:$0xf]
  %v59 = vld [vmem:[%s1 + $0x70] sm:$0xf]
  %v60 = vld [vmem:[%s1 + $0x74] sm:$0xf]
  %v61 = vld [vmem:[%s1 + $0x78] sm:$0xf]
  %v62 = vld [vmem:[%s1 + $0x7c] sm:$0xf]
  %v63 = vld [vmem:[%s1 + $0x80] sm:$0xf]
  %v64 = vld [vmem:[%s1 + $0x84] sm:$0xf]
  %v65 = vld [vmem:[%s1 + $0x88] sm:$0xf]
  %v66 = vld [vmem:[%s1 + $0x8c] sm:$0xf]
  %v67 = vld [vmem:[%s1 + $0x90] sm:$0xf]
  %v68 = vld [vmem:[%s1 + $0x94] sm:$0xf]
  %v69 = vld [vmem:[%s1 + $0x98] sm:$0xf]
  %v70 = vld [vmem:[%s1 + $0x9c] sm:$0xf]
  %v71 = vld [vmem:[%s1 + $0xa0] sm:$0xf]
  %v72 = vld [vmem:[%s1 + $0xa4] sm:$0xf]
  %v73 = vld [vmem:[%s1 + $0xa8] sm:$0xf]
  %v74 = vld [vmem:[%s1 + $0xac] sm:$0xf]
  %v75 = vld [vmem:[%s1 + $0xb0] sm:$0xf]
  %v76 = vld [vmem:[%s1 + $0xb4] sm:$0xf]
  %v77 = vld [vmem:[%s1 + $0xb8] sm:$0xf]
  %v78 = vld [vmem:[%s1 + $0xbc] sm:$0xf]
  %v79 = vld [vmem:[%s1 + $0xc0] sm:$0xf]
  %v80 = vld [vmem:[%s1 + $0xc4] sm:$0xf]
  %v81 = vld [vmem:[%s1 + $0xc8] sm:$0xf]
  %v82 = vld [vmem:[%s1 + $0xcc] sm:$0xf]
  %v83 = vld [vmem:[%s1 + $0xd0] sm:$0xf]
  %v84 = vld [vmem:[%s1 + $0xd4] sm:$0xf]
  %v85 = vld [vmem:[%s1 + $0xd8] sm:$0xf]
  %v86 = vld [vmem:[%s1 + $0xdc] sm:$0xf]
  %v87 = vld [vmem:[%s1 + $0xe0] sm:$0xf]
  %v88 = vld [vmem:[%s1 + $0xe4] sm:$0xf]
  %v89 = vld [vmem:[%s1 + $0xe8] sm:$0xf]
  %v90 = vld [vmem:[%s1 + $0xec] sm:$0xf]
  %v91 = vld [vmem:[%s1 + $0xf0] sm:$0xf]
  %v92 = vld [vmem:[%s1 + $0xf4] sm:$0xf]
  %v93 = vld [vmem:[%s1 + $0xf8] sm:$0xf]
  %v94 = vld [vmem:[%s1 + $0xfc] sm:$0xf]
  %v95 = vld [vmem:[%s2] sm:$0x1]
  %v97 = vlaneseq
  %v98 = vshrl.u32 %v97, 7
  %v99 = vsub.s32 0, %v98
  %v100 = vrot.slane %v95, %v99
  %v106 = vunpack.c.l.b16 %v27
  %v107 = vunpack.c.h.b16 %v27
  %v108 = vunpack.c.l.b16 %v28
  %v109 = vunpack.c.h.b16 %v28
  %v110 = vunpack.c.l.b16 %v29
  %v111 = vunpack.c.h.b16 %v29
  %v112 = vunpack.c.l.b16 %v30
  %v113 = vunpack.c.h.b16 %v30
  %v114 = vpack.c.b16 %v110, %v106
  %v115 = vpack.c.b16 %v111, %v107
  %v116 = vpack.c.b16 %v112, %v108
  %v117 = vpack.c.b16 %v113, %v109
  %v186 = vunpack.c.l.b16 %v31
  %v187 = vunpack.c.l.b16 %v32
  %v188 = vunpack.c.l.b16 %v33
  %v189 = vunpack.c.l.b16 %v34
  %v190 = vunpack.c.l.b16 %v35
  %v191 = vunpack.c.l.b16 %v36
  %v192 = vunpack.c.l.b16 %v37
  %v193 = vunpack.c.l.b16 %v38
  %v194 = vunpack.c.l.b16 %v39
  %v195 = vunpack.c.l.b16 %v40
  %v196 = vunpack.c.l.b16 %v41
  %v197 = vunpack.c.l.b16 %v42
  %v198 = vunpack.c.l.b16 %v43
  %v199 = vunpack.c.l.b16 %v44
  %v200 = vunpack.c.l.b16 %v45
  %v201 = vunpack.c.l.b16 %v46
  %v202 = vunpack.c.l.b16 %v47
  %v203 = vunpack.c.l.b16 %v48
  %v204 = vunpack.c.l.b16 %v49
  %v205 = vunpack.c.l.b16 %v50
  %v206 = vunpack.c.l.b16 %v51
  %v207 = vunpack.c.l.b16 %v52
  %v208 = vunpack.c.l.b16 %v53
  %v209 = vunpack.c.l.b16 %v54
  %v210 = vunpack.c.l.b16 %v55
  %v211 = vunpack.c.l.b16 %v56
  %v212 = vunpack.c.l.b16 %v57
  %v213 = vunpack.c.l.b16 %v58
  %v214 = vunpack.c.l.b16 %v59
  %v215 = vunpack.c.l.b16 %v60
  %v216 = vunpack.c.l.b16 %v61
  %v217 = vunpack.c.l.b16 %v62
  %v218 = vunpack.c.l.b16 %v63
  %v219 = vunpack.c.l.b16 %v64
  %v220 = vunpack.c.l.b16 %v65
  %v221 = vunpack.c.l.b16 %v66
  %v222 = vunpack.c.l.b16 %v67
  %v223 = vunpack.c.l.b16 %v68
  %v224 = vunpack.c.l.b16 %v69
  %v225 = vunpack.c.l.b16 %v70
  %v226 = vunpack.c.l.b16 %v71
  %v227 = vunpack.c.l.b16 %v72
  %v228 = vunpack.c.l.b16 %v73
  %v229 = vunpack.c.l.b16 %v74
  %v230 = vunpack.c.l.b16 %v75
  %v231 = vunpack.c.l.b16 %v76
  %v232 = vunpack.c.l.b16 %v77
  %v233 = vunpack.c.l.b16 %v78
  %v234 = vunpack.c.l.b16 %v79
  %v235 = vunpack.c.l.b16 %v80
  %v236 = vunpack.c.l.b16 %v81
  %v237 = vunpack.c.l.b16 %v82
  %v238 = vunpack.c.l.b16 %v83
  %v239 = vunpack.c.l.b16 %v84
  %v240 = vunpack.c.l.b16 %v85
  %v241 = vunpack.c.l.b16 %v86
  %v242 = vunpack.c.l.b16 %v87
  %v243 = vunpack.c.l.b16 %v88
  %v244 = vunpack.c.l.b16 %v89
  %v245 = vunpack.c.l.b16 %v90
  %v246 = vunpack.c.l.b16 %v91
  %v247 = vunpack.c.l.b16 %v92
  %v248 = vunpack.c.l.b16 %v93
  %v249 = vunpack.c.l.b16 %v94
  %v250 = vpack.c.b16 %v187, %v186
  %v251 = vpack.c.b16 %v189, %v188
  %v252 = vpack.c.b16 %v191, %v190
  %v253 = vpack.c.b16 %v193, %v192
  %v254 = vpack.c.b16 %v195, %v194
  %v255 = vpack.c.b16 %v197, %v196
  %v256 = vpack.c.b16 %v199, %v198
  %v257 = vpack.c.b16 %v201, %v200
  %v258 = vpack.c.b16 %v203, %v202
  %v259 = vpack.c.b16 %v205, %v204
  %v260 = vpack.c.b16 %v207, %v206
  %v261 = vpack.c.b16 %v209, %v208
  %v262 = vpack.c.b16 %v211, %v210
  %v263 = vpack.c.b16 %v213, %v212
  %v264 = vpack.c.b16 %v215, %v214
  %v265 = vpack.c.b16 %v217, %v216
  %v266 = vpack.c.b16 %v219, %v218
  %v267 = vpack.c.b16 %v221, %v220
  %v268 = vpack.c.b16 %v223, %v222
  %v269 = vpack.c.b16 %v225, %v224
  %v270 = vpack.c.b16 %v227, %v226
  %v271 = vpack.c.b16 %v229, %v228
  %v272 = vpack.c.b16 %v231, %v230
  %v273 = vpack.c.b16 %v233, %v232
  %v274 = vpack.c.b16 %v235, %v234
  %v275 = vpack.c.b16 %v237, %v236
  %v276 = vpack.c.b16 %v239, %v238
  %v277 = vpack.c.b16 %v241, %v240
  %v278 = vpack.c.b16 %v243, %v242
  %v279 = vpack.c.b16 %v245, %v244
  %v280 = vpack.c.b16 %v247, %v246
  %v281 = vpack.c.b16 %v249, %v248
  %314 = vmatprep.subr.bf16.mxu0 0
  %315 = vmatpush1.bf16.msra.mxu0 %v250
  %316 = vmatprep.subr.bf16.mxu0 0
  %317 = vmatpush1.bf16.msra.mxu0 %v251
  %318 = vmatprep.subr.bf16.mxu0 0
  %319 = vmatpush1.bf16.msra.mxu0 %v252
  %320 = vmatprep.subr.bf16.mxu0 0
  %321 = vmatpush1.bf16.msra.mxu0 %v253
  %322 = vmatprep.subr.bf16.mxu0 0
  %323 = vmatpush1.bf16.msra.mxu0 %v254
  %324 = vmatprep.subr.bf16.mxu0 0
  %325 = vmatpush1.bf16.msra.mxu0 %v255
  %326 = vmatprep.subr.bf16.mxu0 0
  %327 = vmatpush1.bf16.msra.mxu0 %v256
  %328 = vmatprep.subr.bf16.mxu0 0
  %329 = vmatpush1.bf16.msra.mxu0 %v257
  %330 = vmatprep.subr.bf16.mxu0 0
  %331 = vmatpush1.bf16.msra.mxu0 %v258
  %332 = vmatprep.subr.bf16.mxu0 0
  %333 = vmatpush1.bf16.msra.mxu0 %v259
  %334 = vmatprep.subr.bf16.mxu0 0
  %335 = vmatpush1.bf16.msra.mxu0 %v260
  %336 = vmatprep.subr.bf16.mxu0 0
  %337 = vmatpush1.bf16.msra.mxu0 %v261
  %338 = vmatprep.subr.bf16.mxu0 0
  %339 = vmatpush1.bf16.msra.mxu0 %v262
  %340 = vmatprep.subr.bf16.mxu0 0
  %341 = vmatpush1.bf16.msra.mxu0 %v263
  %342 = vmatprep.subr.bf16.mxu0 0
  %343 = vmatpush1.bf16.msra.mxu0 %v264
  %344 = vmatprep.subr.bf16.mxu0 0
  %345 = vmatpush1.bf16.msra.mxu0 %v265
  %346 = vmatprep.mubr.bf16.mxu0 %v115
  %347 = vmatmul.mubr.bf16.gmra.mrb[0].mxu0 %v114
  %v348 = vpop.f32.mrb[0].mxu0
  %v349 = vadd.f32 %v100, %v348
  %v350 = vpop.f32.mrb[0].mxu0
  %v351 = vpop.f32.mrb[0].mxu0
  %v352 = vadd.f32 %v100, %v351
  %v353 = vpop.f32.mrb[0].mxu0
  %354 = vdwg.mxu0
  %355 = vmatprep.subr.bf16.mxu0 0
  %356 = vmatpush1.bf16.msra.mxu0 %v266
  %357 = vmatprep.subr.bf16.mxu0 0
  %358 = vmatpush1.bf16.msra.mxu0 %v267
  %359 = vmatprep.subr.bf16.mxu0 0
  %360 = vmatpush1.bf16.msra.mxu0 %v268
  %361 = vmatprep.subr.bf16.mxu0 0
  %362 = vmatpush1.bf16.msra.mxu0 %v269
  %363 = vmatprep.subr.bf16.mxu0 0
  %364 = vmatpush1.bf16.msra.mxu0 %v270
  %365 = vmatprep.subr.bf16.mxu0 0
  %366 = vmatpush1.bf16.msra.mxu0 %v271
  %367 = vmatprep.subr.bf16.mxu0 0
  %368 = vmatpush1.bf16.msra.mxu0 %v272
  %369 = vmatprep.subr.bf16.mxu0 0
  %370 = vmatpush1.bf16.msra.mxu0 %v273
  %371 = vmatprep.subr.bf16.mxu0 0
  %372 = vmatpush1.bf16.msra.mxu0 %v274
  %373 = vmatprep.subr.bf16.mxu0 0
  %374 = vmatpush1.bf16.msra.mxu0 %v275
  %375 = vmatprep.subr.bf16.mxu0 0
  %376 = vmatpush1.bf16.msra.mxu0 %v276
  %377 = vmatprep.subr.bf16.mxu0 0
  %378 = vmatpush1.bf16.msra.mxu0 %v277
  %379 = vmatprep.subr.bf16.mxu0 0
  %380 = vmatpush1.bf16.msra.mxu0 %v278
  %381 = vmatprep.subr.bf16.mxu0 0
  %382 = vmatpush1.bf16.msra.mxu0 %v279
  %383 = vmatprep.subr.bf16.mxu0 0
  %384 = vmatpush1.bf16.msra.mxu0 %v280
  %385 = vmatprep.subr.bf16.mxu0 0
  %386 = vmatpush1.bf16.msra.mxu0 %v281
  %387 = vmatprep.mubr.bf16.mxu0 %v117
  %388 = vmatmul.mubr.bf16.gmra.mrb[0].mxu0 %v116
  %v389 = vpop.f32.mrb[0].mxu0
  %v390 = vadd.f32 %v349, %v389
  %v391 = vpop.f32.mrb[0].mxu0
  %v392 = vpop.f32.mrb[0].mxu0
  %v393 = vadd.f32 %v352, %v392
  %v394 = vpop.f32.mrb[0].mxu0
  %395 = vdwg.mxu0
  %v396 = vmax.f32 %v390, 0.0
  %v397 = vmax.f32 %v393, 0.0
  %v398 = vpack.c.bf16 %v397, %v396
  %v399 = vld [vmem:[%s3] sm:$0xf]
  %v400 = vld [vmem:[%s3 + $0x4] sm:$0xf]
  %v401 = vld [vmem:[%s3 + $0x8] sm:$0xf]
  %v402 = vld [vmem:[%s3 + $0xc] sm:$0xf]
  %v403 = vld [vmem:[%s3 + $0x10] sm:$0xf]
  %v404 = vld [vmem:[%s3 + $0x14] sm:$0xf]
  %v405 = vld [vmem:[%s3 + $0x18] sm:$0xf]
  %v406 = vld [vmem:[%s3 + $0x1c] sm:$0xf]
  %v407 = vld [vmem:[%s3 + $0x20] sm:$0xf]
  %v408 = vld [vmem:[%s3 + $0x24] sm:$0xf]
  %v409 = vld [vmem:[%s3 + $0x28] sm:$0xf]
  %v410 = vld [vmem:[%s3 + $0x2c] sm:$0xf]
  %v411 = vld [vmem:[%s3 + $0x30] sm:$0xf]
  %v412 = vld [vmem:[%s3 + $0x34] sm:$0xf]
  %v413 = vld [vmem:[%s3 + $0x38] sm:$0xf]
  %v414 = vld [vmem:[%s3 + $0x3c] sm:$0xf]
  %v415 = vld [vmem:[%s4] sm:$0x1]
  %v417 = vlaneseq
  %v418 = vshrl.u32 %v417, 7
  %v419 = vsub.s32 0, %v418
  %v420 = vrot.slane %v415, %v419
  %v438 = vunpack.c.l.b16 %v399
  %v439 = vunpack.c.l.b16 %v400
  %v440 = vunpack.c.l.b16 %v401
  %v441 = vunpack.c.l.b16 %v402
  %v442 = vunpack.c.l.b16 %v403
  %v443 = vunpack.c.l.b16 %v404
  %v444 = vunpack.c.l.b16 %v405
  %v445 = vunpack.c.l.b16 %v406
  %v446 = vunpack.c.l.b16 %v407
  %v447 = vunpack.c.l.b16 %v408
  %v448 = vunpack.c.l.b16 %v409
  %v449 = vunpack.c.l.b16 %v410
  %v450 = vunpack.c.l.b16 %v411
  %v451 = vunpack.c.l.b16 %v412
  %v452 = vunpack.c.l.b16 %v413
  %v453 = vunpack.c.l.b16 %v414
  %v454 = vpack.c.b16 %v439, %v438
  %v455 = vpack.c.b16 %v441, %v440
  %v456 = vpack.c.b16 %v443, %v442
  %v457 = vpack.c.b16 %v445, %v444
  %v458 = vpack.c.b16 %v447, %v446
  %v459 = vpack.c.b16 %v449, %v448
  %v460 = vpack.c.b16 %v451, %v450
  %v461 = vpack.c.b16 %v453, %v452
  %470 = vmatprep.subr.bf16.mxu0 0
  %471 = vmatpush1.bf16.msra.mxu0 %v454
  %472 = vmatprep.subr.bf16.mxu0 0
  %473 = vmatpush1.bf16.msra.mxu0 %v455
  %474 = vmatprep.subr.bf16.mxu0 0
  %475 = vmatpush1.bf16.msra.mxu0 %v456
  %476 = vmatprep.subr.bf16.mxu0 0
  %477 = vmatpush1.bf16.msra.mxu0 %v457
  %478 = vmatprep.subr.bf16.mxu0 0
  %479 = vmatpush1.bf16.msra.mxu0 %v458
  %480 = vmatprep.subr.bf16.mxu0 0
  %481 = vmatpush1.bf16.msra.mxu0 %v459
  %482 = vmatprep.subr.bf16.mxu0 0
  %483 = vmatpush1.bf16.msra.mxu0 %v460
  %484 = vmatprep.subr.bf16.mxu0 0
  %485 = vmatpush1.bf16.msra.mxu0 %v461
  %486 = vmatprep.subr.bf16.mxu0 0
  %487 = vmatpush1.bf16.msra.mxu0 0
  %488 = vmatprep.subr.bf16.mxu0 0
  %489 = vmatpush1.bf16.msra.mxu0 0
  %490 = vmatprep.subr.bf16.mxu0 0
  %491 = vmatpush1.bf16.msra.mxu0 0
  %492 = vmatprep.subr.bf16.mxu0 0
  %493 = vmatpush1.bf16.msra.mxu0 0
  %494 = vmatprep.subr.bf16.mxu0 0
  %495 = vmatpush1.bf16.msra.mxu0 0
  %496 = vmatprep.subr.bf16.mxu0 0
  %497 = vmatpush1.bf16.msra.mxu0 0
  %498 = vmatprep.subr.bf16.mxu0 0
  %499 = vmatpush1.bf16.msra.mxu0 0
  %500 = vmatprep.subr.bf16.mxu0 0
  %501 = vmatpush1.bf16.msra.mxu0 0
  %502 = vmatprep.mubr.bf16.mxu0 0
  %503 = vmatmul.mubr.bf16.gmra.mrb[0].mxu0 %v398
  %v504 = vpop.f32.mrb[0].mxu0
  %v505 = vadd.f32 %v420, %v504
  %v506 = vpop.f32.mrb[0].mxu0
  %v507 = vpop.f32.mrb[0].mxu0
  %v508 = vadd.f32 %v420, %v507
  %v509 = vpop.f32.mrb[0].mxu0
  %510 = vdwg.mxu0
  %v511 = vmax.f32 %v505, 0.0
  %v512 = vmax.f32 %v508, 0.0
  %v513 = vpack.c.bf16 %v512, %v511
  %v514 = vld [vmem:[%s5] sm:$0xf]
  %v515 = vld [vmem:[%s5 + $0x4] sm:$0xf]
  %v516 = vld [vmem:[%s5 + $0x8] sm:$0xf]
  %v517 = vld [vmem:[%s5 + $0xc] sm:$0xf]
  %v518 = vld [vmem:[%s5 + $0x10] sm:$0xf]
  %v519 = vld [vmem:[%s5 + $0x14] sm:$0xf]
  %v520 = vld [vmem:[%s5 + $0x18] sm:$0xf]
  %v521 = vld [vmem:[%s5 + $0x1c] sm:$0xf]
  %v522 = vld [vmem:[%s5 + $0x20] sm:$0xf]
  %v523 = vld [vmem:[%s5 + $0x24] sm:$0xf]
  %v524 = vld [vmem:[%s5 + $0x28] sm:$0xf]
  %v525 = vld [vmem:[%s5 + $0x2c] sm:$0xf]
  %v526 = vld [vmem:[%s5 + $0x30] sm:$0xf]
  %v527 = vld [vmem:[%s5 + $0x34] sm:$0xf]
  %v528 = vld [vmem:[%s5 + $0x38] sm:$0xf]
  %v529 = vld [vmem:[%s5 + $0x3c] sm:$0xf]
  %v530 = vld [vmem:[%s6] sm:$0x1]
  %v532 = vlaneseq
  %v533 = vshrl.u32 %v532, 7
  %v534 = vsub.s32 0, %v533
  %v535 = vrot.slane %v530, %v534
  %v553 = vunpack.c.l.b16 %v514
  %v554 = vunpack.c.l.b16 %v515
  %v555 = vunpack.c.l.b16 %v516
  %v556 = vunpack.c.l.b16 %v517
  %v557 = vunpack.c.l.b16 %v518
  %v558 = vunpack.c.l.b16 %v519
  %v559 = vunpack.c.l.b16 %v520
  %v560 = vunpack.c.l.b16 %v521
  %v561 = vunpack.c.l.b16 %v522
  %v562 = vunpack.c.l.b16 %v523
  %v563 = vunpack.c.l.b16 %v524
  %v564 = vunpack.c.l.b16 %v525
  %v565 = vunpack.c.l.b16 %v526
  %v566 = vunpack.c.l.b16 %v527
  %v567 = vunpack.c.l.b16 %v528
  %v568 = vunpack.c.l.b16 %v529
  %v569 = vpack.c.b16 %v554, %v553
  %v570 = vpack.c.b16 %v556, %v555
  %v571 = vpack.c.b16 %v558, %v557
  %v572 = vpack.c.b16 %v560, %v559
  %v573 = vpack.c.b16 %v562, %v561
  %v574 = vpack.c.b16 %v564, %v563
  %v575 = vpack.c.b16 %v566, %v565
  %v576 = vpack.c.b16 %v568, %v567
  %585 = vmatprep.subr.bf16.mxu0 0
  %586 = vmatpush1.bf16.msra.mxu0 %v569
  %587 = vmatprep.subr.bf16.mxu0 0
  %588 = vmatpush1.bf16.msra.mxu0 %v570
  %589 = vmatprep.subr.bf16.mxu0 0
  %590 = vmatpush1.bf16.msra.mxu0 %v571
  %591 = vmatprep.subr.bf16.mxu0 0
  %592 = vmatpush1.bf16.msra.mxu0 %v572
  %593 = vmatprep.subr.bf16.mxu0 0
  %594 = vmatpush1.bf16.msra.mxu0 %v573
  %595 = vmatprep.subr.bf16.mxu0 0
  %596 = vmatpush1.bf16.msra.mxu0 %v574
  %597 = vmatprep.subr.bf16.mxu0 0
  %598 = vmatpush1.bf16.msra.mxu0 %v575
  %599 = vmatprep.subr.bf16.mxu0 0
  %600 = vmatpush1.bf16.msra.mxu0 %v576
  %601 = vmatprep.subr.bf16.mxu0 0
  %602 = vmatpush1.bf16.msra.mxu0 0
  %603 = vmatprep.subr.bf16.mxu0 0
  %604 = vmatpush1.bf16.msra.mxu0 0
  %605 = vmatprep.subr.bf16.mxu0 0
  %606 = vmatpush1.bf16.msra.mxu0 0
  %607 = vmatprep.subr.bf16.mxu0 0
  %608 = vmatpush1.bf16.msra.mxu0 0
  %609 = vmatprep.subr.bf16.mxu0 0
  %610 = vmatpush1.bf16.msra.mxu0 0
  %611 = vmatprep.subr.bf16.mxu0 0
  %612 = vmatpush1.bf16.msra.mxu0 0
  %613 = vmatprep.subr.bf16.mxu0 0
  %614 = vmatpush1.bf16.msra.mxu0 0
  %615 = vmatprep.subr.bf16.mxu0 0
  %616 = vmatpush1.bf16.msra.mxu0 0
  %617 = vmatprep.mubr.bf16.mxu0 0
  %618 = vmatmul.mubr.bf16.gmra.mrb[0].mxu0 %v513
  %v619 = vpop.f32.mrb[0].mxu0
  %v620 = vadd.f32 %v535, %v619
  %v621 = vpop.f32.mrb[0].mxu0
  %v622 = vpop.f32.mrb[0].mxu0
  %v623 = vadd.f32 %v535, %v622
  %v624 = vpop.f32.mrb[0].mxu0
  %625 = vdwg.mxu0
  %626 = vst [vmem:[%s7] sm:$0xff] %v620
  %627 = vst [vmem:[%s7 + $0x8] sm:$0xff] %v623
  // Predicated region
  $region30: #{net_forward.9} parent=0 // pred_check
    _
  $region31: #{net_forward.9} parent=0 // pred_check_branch
    %629 = sbr.rel (0) target = $region33
  $region32: #{net_forward.9} parent=0 // pred_region
    _
  $region33: #{net_forward.9} parent=0 // pred_fallthru
    _
  // Predicated region
  $region34: #{net_forward.9} parent=0 // pred_check
    _
  $region35: #{net_forward.9} parent=0 // pred_check_branch
    %631 = sbr.rel (0) target = $region37
  $region36: #{net_forward.9} parent=0 // pred_region
    _
  $region37: #{net_forward.9} parent=0 // pred_fallthru
    _

</llo_original>
